<compile_context>
chip_gen: v6e
topology: v6e:2x2x1
jax: 0.10.0
libtpu: 0.0.40
codegen_flags: <defaults>
</compile_context>

<pallas_src>
import functools

import jax
import jax.numpy as jnp
from jax.experimental import pallas as pl
from jax.experimental.pallas import tpu as pltpu


def _round_up(x, m):
    return (x + m - 1) // m * m


# --------------------------------------------------------------------------- #
# Pallas kernels
# --------------------------------------------------------------------------- #
def _ce_kernel(w_ref, ep_ref, slab_ref, ediff_ref, lab_ref, o_ref, *,
               num_classes, ignore_index):
    """Per-(sample, chunk) partial sums of all pixel-wise loss terms.

    grid = (N, num_chunks, num_blocks).  slab block = (1, 2C, R, 128): the class
    axis is a batch of (R,128) pixel tiles, so class reductions are pure VALU.
    o_ref is a (1,1,8,128) accumulator; term k lives in sublane k (lane partials),
    the cross-lane sum happens in the wrapper."""
    n = pl.program_id(0)
    b = pl.program_id(2)

    @pl.when(b == 0)
    def _():
        o_ref[...] = jnp.zeros_like(o_ref)

    C = num_classes
    packed = lab_ref[0]                               # (R, 128) i32
    tgt = packed & 0x1FF                              # parse label (padding -> ignore_index)
    ecode = packed >> 9                               # 0/1 edge label, 2 = padded pixel

    # ---- parse / proj cross entropy (class axis handled plane-by-plane) ----
    def stream_ce(base):
        m = slab_ref[0, base]                         # running max (exact in storage dtype)
        for c in range(1, C):
            m = jnp.maximum(m, slab_ref[0, base + c])
        m = m.astype(jnp.float32)
        s = jnp.zeros_like(m)
        sel = jnp.zeros_like(m)
        for c in range(C):
            z = slab_ref[0, base + c].astype(jnp.float32) - m
            s = s + jnp.exp(z)
            sel = jnp.where(tgt == c, z, sel)         # ignore/pad label matches nothing -> 0
        return jnp.log(s) - sel                       # (R,128) per-pixel CE (shift cancels)

    valid = (tgt != ignore_index).astype(jnp.float32)
    ce_parse = stream_ce(0) * valid                   # ignore_index pixels contribute 0
    ce_proj = stream_ce(C) * valid

    # ---- edge CE = softplus of the "wrong class" logit margin ----
    d = ediff_ref[0].astype(jnp.float32)              # l1 - l0
    a = jnp.where(ecode == 1, -d, d)
    ce_edge = jnp.maximum(a, 0.0) + jnp.log(1.0 + jnp.exp(-jnp.abs(a)))
    w_pix = jnp.where(ecode == 1, w_ref[1],
                      jnp.where(ecode == 0, w_ref[0], 0.0))   # padding -> weight 0

    inv_ep = 1.0 / (ep_ref[n] + 1.0)                  # per-sample scalar 1/(edge_p_num+1)
    edge_pos = (ecode == 1).astype(jnp.float32)
    att = ce_parse * edge_pos * inv_ep

    # ---- lane-parallel accumulation: one sublane per term ----
    terms = (ce_parse, valid, ce_proj, w_pix * ce_edge, w_pix, att)
    sub = jax.lax.broadcasted_iota(jnp.int32, (1, 1, 8, 128), 2)
    upd = jnp.zeros((1, 1, 8, 128), jnp.float32)
    for k, t in enumerate(terms):
        row = jnp.sum(t, axis=0, keepdims=True)       # (1,128) lane partials
        upd = jnp.where(sub == k, row[None, None], upd)
    o_ref[...] += upd


def _dist_kernel(m_ref, sidr_ref, sidc_ref, o_ref, *, n_obj, bs, delta_d):
    """Anchor (pairwise mean distance) hinge term, all bs samples in one step."""
    m = m_ref[...].astype(jnp.float32)                # (K, F), K = bs * n_obj
    K = m.shape[0]
    gram = jax.lax.dot_general(m, m, (((1,), (1,)), ((), ())),
                               preferred_element_type=jnp.float32)     # (K, K)
    sq_row = jnp.sum(m * m, axis=1, keepdims=True)    # (K, 1) squared norms
    r = jax.lax.broadcasted_iota(jnp.int32, (K, K), 0)
    c = jax.lax.broadcasted_iota(jnp.int32, (K, K), 1)
    eye_f = (r == c).astype(jnp.float32)
    sq_col = jnp.sum(gram * eye_f, axis=0, keepdims=True)              # (1, K) diag
    d2 = sq_row + sq_col - 2.0 * gram
    nrm = jnp.sqrt(jnp.maximum(d2, 0.0))
    same = sidr_ref[...] == sidc_ref[...]             # (K, K) same-sample pairs
    mask = same & (r != c)
    hinge = jnp.where(mask, jnp.maximum(2.0 * delta_d - nrm, 0.0), 0.0)
    o_ref[...] = (jnp.sum(hinge * hinge, keepdims=True)
                  / float(n_obj * (n_obj - 1) * bs))


# --------------------------------------------------------------------------- #
# Wrapper reproducing the PyTorch forward
# --------------------------------------------------------------------------- #
def criterion_forward(preds, target, *, loss_weight=(1.0, 1.0, 1.0, 1.0),
                      ignore_index=255, num_classes=11,
                      logits_dtype=jnp.bfloat16, rows_per_step=256, num_chunks=2):
    """preds  = (parse_logits NCHW, edge_logits N2HW, means (bs,n_inst,nf), proj_logits NCHW)
       target = (parse_labels NHW int, edge_labels NHW int {0,1})."""
    parse_logits, edge_logits, means, proj_logits = preds
    parse_t, edge_t = target
    N, H, W = parse_t.shape
    C = num_classes
    HW = H * W
    assert 0 <= ignore_index < 512, "label packing assumes ignore_index < 512"

    # Bilinear upsample (F.upsample align_corners=False semantics).
    def up(x):
        return jax.image.resize(x.astype(jnp.float32),
                                (x.shape[0], x.shape[1], H, W), method="bilinear")

    scale_parse = up(parse_logits)
    scale_proj = up(proj_logits)
    scale_edge = up(edge_logits)

    # Edge class weights (reference computes these with numpy on CPU).
    pos_num = jnp.sum(edge_t == 1).astype(jnp.float32)
    neg_num = jnp.sum(edge_t == 0).astype(jnp.float32)
    weight_pos = neg_num / (pos_num + neg_num)
    weight_neg = pos_num / (pos_num + neg_num)
    weights = jnp.stack([weight_neg, weight_pos]).astype(jnp.float32)         # (2,)

    # Per-sample edge pixel counts; 1/(count+1) is computed in-kernel.
    edge_p_num = jnp.sum(edge_t.reshape(N, -1).astype(jnp.float32), axis=1)   # (N,)

    # ---- pixel tiling: pixels as (rows,128) tiles, classes as a batch axis ----
    RT_raw = -(-HW // 128)                            # 128-lane pixel rows needed
    R_step = min(rows_per_step, _round_up(RT_raw, 8)) # rows per grid step (mult of 8)
    NCH = max(1, num_chunks)                          # parallel chunks (megacore on v7x)
    RT = _round_up(RT_raw, NCH * R_step)              # padded row count
    HW_pad = RT * 128
    NB = RT // (NCH * R_step)                         # blocks per chunk
    pad = HW_pad - HW

    # Combined class-major slab: (N, 2C, RT, 128) in bf16.
    slab = jnp.concatenate([scale_parse.astype(logits_dtype),
                            scale_proj.astype(logits_dtype)], axis=1).reshape(N, 2 * C, HW)
    if pad:
        slab = jnp.pad(slab, ((0, 0), (0, 0), (0, pad)))
    slab = slab.reshape(N, 2 * C, RT, 128)

    # Edge logit difference (l1 - l0): one bf16 plane.
    ediff = (scale_edge[:, 1] - scale_edge[:, 0]).reshape(N, HW).astype(logits_dtype)
    if pad:
        ediff = jnp.pad(ediff, ((0, 0), (0, pad)))
    ediff = ediff.reshape(N, RT, 128)

    # Packed labels: parse label + (edge code << 9); padding -> (ignore_index, code 2).
    tgt_flat = parse_t.reshape(N, HW).astype(jnp.int32)
    ecode_flat = edge_t.reshape(N, HW).astype(jnp.int32)
    if pad:
        tgt_flat = jnp.pad(tgt_flat, ((0, 0), (0, pad)), constant_values=ignore_index)
        ecode_flat = jnp.pad(ecode_flat, ((0, 0), (0, pad)), constant_values=2)
    labels = (tgt_flat + (ecode_flat << 9)).reshape(N, RT, 128)

    smem_spec = pl.BlockSpec(memory_space=pltpu.MemorySpace.SMEM)
    partials = pl.pallas_call(
        functools.partial(_ce_kernel, num_classes=C, ignore_index=ignore_index),
        out_shape=jax.ShapeDtypeStruct((N, NCH, 8, 128), jnp.float32),
        grid=(N, NCH, NB),
        in_specs=[
            smem_spec,                                                   # weights (2,)
            smem_spec,                                                   # edge_p_num (N,)
            pl.BlockSpec((1, 2 * C, R_step, 128),
                         lambda n, ch, b: (n, 0, ch * NB + b, 0)),       # logit slab
            pl.BlockSpec((1, R_step, 128),
                         lambda n, ch, b: (n, ch * NB + b, 0)),          # edge logit diff
            pl.BlockSpec((1, R_step, 128),
                         lambda n, ch, b: (n, ch * NB + b, 0)),          # packed labels
        ],
        out_specs=pl.BlockSpec((1, 1, 8, 128), lambda n, ch, b: (n, ch, 0, 0)),
        compiler_params=pltpu.CompilerParams(
            dimension_semantics=("parallel", "parallel", "arbitrary"),
            vmem_limit_bytes=64 * 1024 * 1024),
    )(weights, edge_p_num, slab, ediff, labels)

    totals = jnp.sum(partials, axis=(0, 1, 3))                           # (8,)
    s_parse, cnt, s_proj, s_edge, s_w, s_att = (totals[k] for k in range(6))
    loss_parse = s_parse / cnt          # CE with ignore_index, mean over valid pixels
    loss_proj = s_proj / cnt
    loss_edge = s_edge / s_w            # weighted CE mean = sum(w*ce) / sum(w)
    loss_att_edge = s_att / N

    # ---- anchor (pairwise mean distance) term: single tiny grid step ----
    bs, n_inst, nf = means.shape
    assert n_inst >= num_classes, "means must provide at least num_classes instance rows"
    if num_classes <= 1:
        loss_anchor = jnp.float32(0.0)
    else:
        K = bs * num_classes
        m_flat = means[:, :num_classes, :].astype(jnp.float32).reshape(K, nf)
        sid = jnp.repeat(jnp.arange(bs, dtype=jnp.int32), num_classes)
        dist = pl.pallas_call(
            functools.partial(_dist_kernel, n_obj=num_classes, bs=bs, delta_d=1.0),
            out_shape=jax.ShapeDtypeStruct((1, 1), jnp.float32),
            grid=(1,),
            in_specs=[
                pl.BlockSpec((K, nf), lambda i: (0, 0)),
                pl.BlockSpec((K, 1), lambda i: (0, 0)),
                pl.BlockSpec((1, K), lambda i: (0, 0)),
            ],
            out_specs=pl.BlockSpec((1, 1), lambda i: (0, 0)),
            compiler_params=pltpu.CompilerParams(dimension_semantics=("arbitrary",)),
        )(m_flat, sid.reshape(K, 1), sid.reshape(1, K))
        loss_anchor = dist[0, 0]

    lw = loss_weight  # NOTE: reference __init__ default has 3 weights but forward uses 4.
    return (lw[0] * (loss_parse + loss_proj) + lw[1] * loss_edge
            + lw[2] * loss_att_edge + lw[3] * loss_anchor)


# --------------------------------------------------------------------------- #
# Example run
# --------------------------------------------------------------------------- #
if __name__ == "__main__":
    key = jax.random.PRNGKey(0)
    N, C, H, W, NF = 2, 11, 16, 16, 32
    ks = jax.random.split(key, 7)

    parse_logits = jax.random.normal(ks[0], (N, C, H, W), jnp.float32)       # preds[0]
    edge_logits = jax.random.normal(ks[1], (N, 2, H, W), jnp.float32)        # preds[1]
    means = jax.random.normal(ks[2], (N, C, NF), jnp.float32)                # preds[2]
    proj_logits = jax.random.normal(ks[3], (N, C, H, W), jnp.float32)        # preds[3]

    parse_t = jax.random.randint(ks[4], (N, H, W), 0, C).astype(jnp.int32)
    ignore_mask = jax.random.bernoulli(ks[5], 0.05, (N, H, W))
    parse_t = jnp.where(ignore_mask, 255, parse_t)                           # target[0]
    edge_t = jax.random.bernoulli(ks[6], 0.3, (N, H, W)).astype(jnp.int32)   # target[1]

    loss = criterion_forward(
        (parse_logits, edge_logits, means, proj_logits),
        (parse_t, edge_t),
        loss_weight=(1.0, 1.0, 1.0, 1.0),
        ignore_index=255,
        num_classes=11,
    )
    jax.block_until_ready(loss)
    print("KERNEL_OK")
</pallas_src>

<mosaic_0001>
module attributes {stable_mosaic.version = 11 : i64} {
  func.func @_ce_kernel(%arg0: i32, %arg1: i32, %arg2: i32, %arg3: memref<2xf32, #tpu.memory_space<smem>>, %arg4: memref<2xf32, #tpu.memory_space<smem>>, %arg5: memref<1x22x8x128xbf16, #tpu.memory_space<vmem>>, %arg6: memref<1x8x128xbf16, #tpu.memory_space<vmem>>, %arg7: memref<1x8x128xi32, #tpu.memory_space<vmem>>, %arg8: memref<1x1x8x128xf32, #tpu.memory_space<vmem>>) attributes {dimension_semantics = [#tpu.dimension_semantics<parallel>, #tpu.dimension_semantics<parallel>, #tpu.dimension_semantics<arbitrary>], iteration_bounds = array<i64: 2, 2, 1>, scalar_prefetch = 0 : i64, scratch_operands = 0 : i64, tpu.core_type = #tpu.core_type<tc>, window_params = [{transform_indices = @transform_0, window_bounds = array<i64: 2>}, {transform_indices = @transform_1, window_bounds = array<i64: 2>}, {transform_indices = @transform_2, window_bounds = array<i64: 1, 22, 8, 128>}, {transform_indices = @transform_3, window_bounds = array<i64: 1, 8, 128>}, {transform_indices = @transform_4, window_bounds = array<i64: 1, 8, 128>}, {transform_indices = @transform_5, window_bounds = array<i64: 1, 1, 8, 128>}]} {
    %c0_i32 = arith.constant 0 : i32
    %0 = arith.cmpi eq, %arg2, %c0_i32 : i32
    %1 = arith.extui %0 : i1 to i32
    %c0_i32_0 = arith.constant 0 : i32
    %2 = arith.cmpi ne, %1, %c0_i32_0 : i32
    scf.if %2 {
      %cst_211 = arith.constant 0.000000e+00 : f32
      %381 = vector.broadcast %cst_211 : f32 to vector<1x1x8x128xf32>
      %c0_212 = arith.constant 0 : index
      %c0_213 = arith.constant 0 : index
      %c0_214 = arith.constant 0 : index
      %c0_215 = arith.constant 0 : index
      %382 = vector.load %arg8[%c0_212, %c0_213, %c0_214, %c0_215] : memref<1x1x8x128xf32, #tpu.memory_space<vmem>>, vector<1x1x8x128xf32>
      tpu.vector_store %arg8[%c0_212, %c0_213, %c0_214, %c0_215], %381 {strides = array<i32>} : memref<1x1x8x128xf32, #tpu.memory_space<vmem>>, vector<1x1x8x128xf32>,
    } else {
    }
    %c0 = arith.constant 0 : index
    %c0_1 = arith.constant 0 : index
    %c0_2 = arith.constant 0 : index
    %3 = vector.load %arg7[%c0, %c0_1, %c0_2] : memref<1x8x128xi32, #tpu.memory_space<vmem>>, vector<1x8x128xi32>
    %4 = vector.shape_cast %3 : vector<1x8x128xi32> to vector<8x128xi32>
    %c511_i32 = arith.constant 511 : i32
    %5 = vector.broadcast %c511_i32 : i32 to vector<8x128xi32>
    %6 = arith.andi %4, %5 : vector<8x128xi32>
    %c9_i32 = arith.constant 9 : i32
    %7 = vector.broadcast %c9_i32 : i32 to vector<8x128xi32>
    %8 = arith.shrsi %4, %7 : vector<8x128xi32>
    %c255_i32 = arith.constant 255 : i32
    %9 = vector.broadcast %c255_i32 : i32 to vector<8x128xi32>
    %10 = arith.cmpi ne, %6, %9 : vector<8x128xi32>
    %11 = arith.extui %10 : vector<8x128xi1> to vector<8x128xi32>
    %12 = arith.sitofp %11 : vector<8x128xi32> to vector<8x128xf32>
    %c0_3 = arith.constant 0 : index
    %c0_4 = arith.constant 0 : index
    %c0_5 = arith.constant 0 : index
    %c0_6 = arith.constant 0 : index
    %13 = vector.load %arg5[%c0_3, %c0_4, %c0_5, %c0_6] : memref<1x22x8x128xbf16, #tpu.memory_space<vmem>>, vector<1x1x8x128xbf16>
    %14 = vector.shape_cast %13 : vector<1x1x8x128xbf16> to vector<8x128xbf16>
    %c0_7 = arith.constant 0 : index
    %c1 = arith.constant 1 : index
    %c0_8 = arith.constant 0 : index
    %c0_9 = arith.constant 0 : index
    %15 = vector.load %arg5[%c0_7, %c1, %c0_8, %c0_9] : memref<1x22x8x128xbf16, #tpu.memory_space<vmem>>, vector<1x1x8x128xbf16>
    %16 = vector.shape_cast %15 : vector<1x1x8x128xbf16> to vector<8x128xbf16>
    %17 = arith.maximumf %14, %16 : vector<8x128xbf16>
    %c0_10 = arith.constant 0 : index
    %c2 = arith.constant 2 : index
    %c0_11 = arith.constant 0 : index
    %c0_12 = arith.constant 0 : index
    %18 = vector.load %arg5[%c0_10, %c2, %c0_11, %c0_12] : memref<1x22x8x128xbf16, #tpu.memory_space<vmem>>, vector<1x1x8x128xbf16>
    %19 = vector.shape_cast %18 : vector<1x1x8x128xbf16> to vector<8x128xbf16>
    %20 = arith.maximumf %17, %19 : vector<8x128xbf16>
    %c0_13 = arith.constant 0 : index
    %c3 = arith.constant 3 : index
    %c0_14 = arith.constant 0 : index
    %c0_15 = arith.constant 0 : index
    %21 = vector.load %arg5[%c0_13, %c3, %c0_14, %c0_15] : memref<1x22x8x128xbf16, #tpu.memory_space<vmem>>, vector<1x1x8x128xbf16>
    %22 = vector.shape_cast %21 : vector<1x1x8x128xbf16> to vector<8x128xbf16>
    %23 = arith.maximumf %20, %22 : vector<8x128xbf16>
    %c0_16 = arith.constant 0 : index
    %c4 = arith.constant 4 : index
    %c0_17 = arith.constant 0 : index
    %c0_18 = arith.constant 0 : index
    %24 = vector.load %arg5[%c0_16, %c4, %c0_17, %c0_18] : memref<1x22x8x128xbf16, #tpu.memory_space<vmem>>, vector<1x1x8x128xbf16>
    %25 = vector.shape_cast %24 : vector<1x1x8x128xbf16> to vector<8x128xbf16>
    %26 = arith.maximumf %23, %25 : vector<8x128xbf16>
    %c0_19 = arith.constant 0 : index
    %c5 = arith.constant 5 : index
    %c0_20 = arith.constant 0 : index
    %c0_21 = arith.constant 0 : index
    %27 = vector.load %arg5[%c0_19, %c5, %c0_20, %c0_21] : memref<1x22x8x128xbf16, #tpu.memory_space<vmem>>, vector<1x1x8x128xbf16>
    %28 = vector.shape_cast %27 : vector<1x1x8x128xbf16> to vector<8x128xbf16>
    %29 = arith.maximumf %26, %28 : vector<8x128xbf16>
    %c0_22 = arith.constant 0 : index
    %c6 = arith.constant 6 : index
    %c0_23 = arith.constant 0 : index
    %c0_24 = arith.constant 0 : index
    %30 = vector.load %arg5[%c0_22, %c6, %c0_23, %c0_24] : memref<1x22x8x128xbf16, #tpu.memory_space<vmem>>, vector<1x1x8x128xbf16>
    %31 = vector.shape_cast %30 : vector<1x1x8x128xbf16> to vector<8x128xbf16>
    %32 = arith.maximumf %29, %31 : vector<8x128xbf16>
    %c0_25 = arith.constant 0 : index
    %c7 = arith.constant 7 : index
    %c0_26 = arith.constant 0 : index
    %c0_27 = arith.constant 0 : index
    %33 = vector.load %arg5[%c0_25, %c7, %c0_26, %c0_27] : memref<1x22x8x128xbf16, #tpu.memory_space<vmem>>, vector<1x1x8x128xbf16>
    %34 = vector.shape_cast %33 : vector<1x1x8x128xbf16> to vector<8x128xbf16>
    %35 = arith.maximumf %32, %34 : vector<8x128xbf16>
    %c0_28 = arith.constant 0 : index
    %c8 = arith.constant 8 : index
    %c0_29 = arith.constant 0 : index
    %c0_30 = arith.constant 0 : index
    %36 = vector.load %arg5[%c0_28, %c8, %c0_29, %c0_30] : memref<1x22x8x128xbf16, #tpu.memory_space<vmem>>, vector<1x1x8x128xbf16>
    %37 = vector.shape_cast %36 : vector<1x1x8x128xbf16> to vector<8x128xbf16>
    %38 = arith.maximumf %35, %37 : vector<8x128xbf16>
    %c0_31 = arith.constant 0 : index
    %c9 = arith.constant 9 : index
    %c0_32 = arith.constant 0 : index
    %c0_33 = arith.constant 0 : index
    %39 = vector.load %arg5[%c0_31, %c9, %c0_32, %c0_33] : memref<1x22x8x128xbf16, #tpu.memory_space<vmem>>, vector<1x1x8x128xbf16>
    %40 = vector.shape_cast %39 : vector<1x1x8x128xbf16> to vector<8x128xbf16>
    %41 = arith.maximumf %38, %40 : vector<8x128xbf16>
    %c0_34 = arith.constant 0 : index
    %c10 = arith.constant 10 : index
    %c0_35 = arith.constant 0 : index
    %c0_36 = arith.constant 0 : index
    %42 = vector.load %arg5[%c0_34, %c10, %c0_35, %c0_36] : memref<1x22x8x128xbf16, #tpu.memory_space<vmem>>, vector<1x1x8x128xbf16>
    %43 = vector.shape_cast %42 : vector<1x1x8x128xbf16> to vector<8x128xbf16>
    %44 = arith.maximumf %41, %43 : vector<8x128xbf16>
    %45 = arith.extf %44 : vector<8x128xbf16> to vector<8x128xf32>
    %cst = arith.constant 0.000000e+00 : f32
    %46 = vector.broadcast %cst : f32 to vector<8x128xf32>
    %cst_37 = arith.constant 0.000000e+00 : f32
    %47 = vector.broadcast %cst_37 : f32 to vector<8x128xf32>
    %c0_38 = arith.constant 0 : index
    %c0_39 = arith.constant 0 : index
    %c0_40 = arith.constant 0 : index
    %c0_41 = arith.constant 0 : index
    %48 = vector.load %arg5[%c0_38, %c0_39, %c0_40, %c0_41] : memref<1x22x8x128xbf16, #tpu.memory_space<vmem>>, vector<1x1x8x128xbf16>
    %49 = vector.shape_cast %48 : vector<1x1x8x128xbf16> to vector<8x128xbf16>
    %50 = arith.extf %49 : vector<8x128xbf16> to vector<8x128xf32>
    %51 = arith.subf %50, %45 : vector<8x128xf32>
    %52 = math.exp %51 : vector<8x128xf32>
    %53 = arith.addf %46, %52 : vector<8x128xf32>
    %c0_i32_42 = arith.constant 0 : i32
    %54 = vector.broadcast %c0_i32_42 : i32 to vector<8x128xi32>
    %55 = arith.cmpi eq, %6, %54 : vector<8x128xi32>
    %56 = arith.select %55, %51, %47 : vector<8x128xi1>, vector<8x128xf32>
    %c0_43 = arith.constant 0 : index
    %c1_44 = arith.constant 1 : index
    %c0_45 = arith.constant 0 : index
    %c0_46 = arith.constant 0 : index
    %57 = vector.load %arg5[%c0_43, %c1_44, %c0_45, %c0_46] : memref<1x22x8x128xbf16, #tpu.memory_space<vmem>>, vector<1x1x8x128xbf16>
    %58 = vector.shape_cast %57 : vector<1x1x8x128xbf16> to vector<8x128xbf16>
    %59 = arith.extf %58 : vector<8x128xbf16> to vector<8x128xf32>
    %60 = arith.subf %59, %45 : vector<8x128xf32>
    %61 = math.exp %60 : vector<8x128xf32>
    %62 = arith.addf %53, %61 : vector<8x128xf32>
    %c1_i32 = arith.constant 1 : i32
    %63 = vector.broadcast %c1_i32 : i32 to vector<8x128xi32>
    %64 = arith.cmpi eq, %6, %63 : vector<8x128xi32>
    %65 = arith.select %64, %60, %56 : vector<8x128xi1>, vector<8x128xf32>
    %c0_47 = arith.constant 0 : index
    %c2_48 = arith.constant 2 : index
    %c0_49 = arith.constant 0 : index
    %c0_50 = arith.constant 0 : index
    %66 = vector.load %arg5[%c0_47, %c2_48, %c0_49, %c0_50] : memref<1x22x8x128xbf16, #tpu.memory_space<vmem>>, vector<1x1x8x128xbf16>
    %67 = vector.shape_cast %66 : vector<1x1x8x128xbf16> to vector<8x128xbf16>
    %68 = arith.extf %67 : vector<8x128xbf16> to vector<8x128xf32>
    %69 = arith.subf %68, %45 : vector<8x128xf32>
    %70 = math.exp %69 : vector<8x128xf32>
    %71 = arith.addf %62, %70 : vector<8x128xf32>
    %c2_i32 = arith.constant 2 : i32
    %72 = vector.broadcast %c2_i32 : i32 to vector<8x128xi32>
    %73 = arith.cmpi eq, %6, %72 : vector<8x128xi32>
    %74 = arith.select %73, %69, %65 : vector<8x128xi1>, vector<8x128xf32>
    %c0_51 = arith.constant 0 : index
    %c3_52 = arith.constant 3 : index
    %c0_53 = arith.constant 0 : index
    %c0_54 = arith.constant 0 : index
    %75 = vector.load %arg5[%c0_51, %c3_52, %c0_53, %c0_54] : memref<1x22x8x128xbf16, #tpu.memory_space<vmem>>, vector<1x1x8x128xbf16>
    %76 = vector.shape_cast %75 : vector<1x1x8x128xbf16> to vector<8x128xbf16>
    %77 = arith.extf %76 : vector<8x128xbf16> to vector<8x128xf32>
    %78 = arith.subf %77, %45 : vector<8x128xf32>
    %79 = math.exp %78 : vector<8x128xf32>
    %80 = arith.addf %71, %79 : vector<8x128xf32>
    %c3_i32 = arith.constant 3 : i32
    %81 = vector.broadcast %c3_i32 : i32 to vector<8x128xi32>
    %82 = arith.cmpi eq, %6, %81 : vector<8x128xi32>
    %83 = arith.select %82, %78, %74 : vector<8x128xi1>, vector<8x128xf32>
    %c0_55 = arith.constant 0 : index
    %c4_56 = arith.constant 4 : index
    %c0_57 = arith.constant 0 : index
    %c0_58 = arith.constant 0 : index
    %84 = vector.load %arg5[%c0_55, %c4_56, %c0_57, %c0_58] : memref<1x22x8x128xbf16, #tpu.memory_space<vmem>>, vector<1x1x8x128xbf16>
    %85 = vector.shape_cast %84 : vector<1x1x8x128xbf16> to vector<8x128xbf16>
    %86 = arith.extf %85 : vector<8x128xbf16> to vector<8x128xf32>
    %87 = arith.subf %86, %45 : vector<8x128xf32>
    %88 = math.exp %87 : vector<8x128xf32>
    %89 = arith.addf %80, %88 : vector<8x128xf32>
    %c4_i32 = arith.constant 4 : i32
    %90 = vector.broadcast %c4_i32 : i32 to vector<8x128xi32>
    %91 = arith.cmpi eq, %6, %90 : vector<8x128xi32>
    %92 = arith.select %91, %87, %83 : vector<8x128xi1>, vector<8x128xf32>
    %c0_59 = arith.constant 0 : index
    %c5_60 = arith.constant 5 : index
    %c0_61 = arith.constant 0 : index
    %c0_62 = arith.constant 0 : index
    %93 = vector.load %arg5[%c0_59, %c5_60, %c0_61, %c0_62] : memref<1x22x8x128xbf16, #tpu.memory_space<vmem>>, vector<1x1x8x128xbf16>
    %94 = vector.shape_cast %93 : vector<1x1x8x128xbf16> to vector<8x128xbf16>
    %95 = arith.extf %94 : vector<8x128xbf16> to vector<8x128xf32>
    %96 = arith.subf %95, %45 : vector<8x128xf32>
    %97 = math.exp %96 : vector<8x128xf32>
    %98 = arith.addf %89, %97 : vector<8x128xf32>
    %c5_i32 = arith.constant 5 : i32
    %99 = vector.broadcast %c5_i32 : i32 to vector<8x128xi32>
    %100 = arith.cmpi eq, %6, %99 : vector<8x128xi32>
    %101 = arith.select %100, %96, %92 : vector<8x128xi1>, vector<8x128xf32>
    %c0_63 = arith.constant 0 : index
    %c6_64 = arith.constant 6 : index
    %c0_65 = arith.constant 0 : index
    %c0_66 = arith.constant 0 : index
    %102 = vector.load %arg5[%c0_63, %c6_64, %c0_65, %c0_66] : memref<1x22x8x128xbf16, #tpu.memory_space<vmem>>, vector<1x1x8x128xbf16>
    %103 = vector.shape_cast %102 : vector<1x1x8x128xbf16> to vector<8x128xbf16>
    %104 = arith.extf %103 : vector<8x128xbf16> to vector<8x128xf32>
    %105 = arith.subf %104, %45 : vector<8x128xf32>
    %106 = math.exp %105 : vector<8x128xf32>
    %107 = arith.addf %98, %106 : vector<8x128xf32>
    %c6_i32 = arith.constant 6 : i32
    %108 = vector.broadcast %c6_i32 : i32 to vector<8x128xi32>
    %109 = arith.cmpi eq, %6, %108 : vector<8x128xi32>
    %110 = arith.select %109, %105, %101 : vector<8x128xi1>, vector<8x128xf32>
    %c0_67 = arith.constant 0 : index
    %c7_68 = arith.constant 7 : index
    %c0_69 = arith.constant 0 : index
    %c0_70 = arith.constant 0 : index
    %111 = vector.load %arg5[%c0_67, %c7_68, %c0_69, %c0_70] : memref<1x22x8x128xbf16, #tpu.memory_space<vmem>>, vector<1x1x8x128xbf16>
    %112 = vector.shape_cast %111 : vector<1x1x8x128xbf16> to vector<8x128xbf16>
    %113 = arith.extf %112 : vector<8x128xbf16> to vector<8x128xf32>
    %114 = arith.subf %113, %45 : vector<8x128xf32>
    %115 = math.exp %114 : vector<8x128xf32>
    %116 = arith.addf %107, %115 : vector<8x128xf32>
    %c7_i32 = arith.constant 7 : i32
    %117 = vector.broadcast %c7_i32 : i32 to vector<8x128xi32>
    %118 = arith.cmpi eq, %6, %117 : vector<8x128xi32>
    %119 = arith.select %118, %114, %110 : vector<8x128xi1>, vector<8x128xf32>
    %c0_71 = arith.constant 0 : index
    %c8_72 = arith.constant 8 : index
    %c0_73 = arith.constant 0 : index
    %c0_74 = arith.constant 0 : index
    %120 = vector.load %arg5[%c0_71, %c8_72, %c0_73, %c0_74] : memref<1x22x8x128xbf16, #tpu.memory_space<vmem>>, vector<1x1x8x128xbf16>
    %121 = vector.shape_cast %120 : vector<1x1x8x128xbf16> to vector<8x128xbf16>
    %122 = arith.extf %121 : vector<8x128xbf16> to vector<8x128xf32>
    %123 = arith.subf %122, %45 : vector<8x128xf32>
    %124 = math.exp %123 : vector<8x128xf32>
    %125 = arith.addf %116, %124 : vector<8x128xf32>
    %c8_i32 = arith.constant 8 : i32
    %126 = vector.broadcast %c8_i32 : i32 to vector<8x128xi32>
    %127 = arith.cmpi eq, %6, %126 : vector<8x128xi32>
    %128 = arith.select %127, %123, %119 : vector<8x128xi1>, vector<8x128xf32>
    %c0_75 = arith.constant 0 : index
    %c9_76 = arith.constant 9 : index
    %c0_77 = arith.constant 0 : index
    %c0_78 = arith.constant 0 : index
    %129 = vector.load %arg5[%c0_75, %c9_76, %c0_77, %c0_78] : memref<1x22x8x128xbf16, #tpu.memory_space<vmem>>, vector<1x1x8x128xbf16>
    %130 = vector.shape_cast %129 : vector<1x1x8x128xbf16> to vector<8x128xbf16>
    %131 = arith.extf %130 : vector<8x128xbf16> to vector<8x128xf32>
    %132 = arith.subf %131, %45 : vector<8x128xf32>
    %133 = math.exp %132 : vector<8x128xf32>
    %134 = arith.addf %125, %133 : vector<8x128xf32>
    %c9_i32_79 = arith.constant 9 : i32
    %135 = vector.broadcast %c9_i32_79 : i32 to vector<8x128xi32>
    %136 = arith.cmpi eq, %6, %135 : vector<8x128xi32>
    %137 = arith.select %136, %132, %128 : vector<8x128xi1>, vector<8x128xf32>
    %c0_80 = arith.constant 0 : index
    %c10_81 = arith.constant 10 : index
    %c0_82 = arith.constant 0 : index
    %c0_83 = arith.constant 0 : index
    %138 = vector.load %arg5[%c0_80, %c10_81, %c0_82, %c0_83] : memref<1x22x8x128xbf16, #tpu.memory_space<vmem>>, vector<1x1x8x128xbf16>
    %139 = vector.shape_cast %138 : vector<1x1x8x128xbf16> to vector<8x128xbf16>
    %140 = arith.extf %139 : vector<8x128xbf16> to vector<8x128xf32>
    %141 = arith.subf %140, %45 : vector<8x128xf32>
    %142 = math.exp %141 : vector<8x128xf32>
    %143 = arith.addf %134, %142 : vector<8x128xf32>
    %c10_i32 = arith.constant 10 : i32
    %144 = vector.broadcast %c10_i32 : i32 to vector<8x128xi32>
    %145 = arith.cmpi eq, %6, %144 : vector<8x128xi32>
    %146 = arith.select %145, %141, %137 : vector<8x128xi1>, vector<8x128xf32>
    %147 = math.log %143 : vector<8x128xf32>
    %148 = arith.subf %147, %146 : vector<8x128xf32>
    %149 = arith.mulf %148, %12 : vector<8x128xf32>
    %c0_84 = arith.constant 0 : index
    %c11 = arith.constant 11 : index
    %c0_85 = arith.constant 0 : index
    %c0_86 = arith.constant 0 : index
    %150 = vector.load %arg5[%c0_84, %c11, %c0_85, %c0_86] : memref<1x22x8x128xbf16, #tpu.memory_space<vmem>>, vector<1x1x8x128xbf16>
    %151 = vector.shape_cast %150 : vector<1x1x8x128xbf16> to vector<8x128xbf16>
    %c0_87 = arith.constant 0 : index
    %c12 = arith.constant 12 : index
    %c0_88 = arith.constant 0 : index
    %c0_89 = arith.constant 0 : index
    %152 = vector.load %arg5[%c0_87, %c12, %c0_88, %c0_89] : memref<1x22x8x128xbf16, #tpu.memory_space<vmem>>, vector<1x1x8x128xbf16>
    %153 = vector.shape_cast %152 : vector<1x1x8x128xbf16> to vector<8x128xbf16>
    %154 = arith.maximumf %151, %153 : vector<8x128xbf16>
    %c0_90 = arith.constant 0 : index
    %c13 = arith.constant 13 : index
    %c0_91 = arith.constant 0 : index
    %c0_92 = arith.constant 0 : index
    %155 = vector.load %arg5[%c0_90, %c13, %c0_91, %c0_92] : memref<1x22x8x128xbf16, #tpu.memory_space<vmem>>, vector<1x1x8x128xbf16>
    %156 = vector.shape_cast %155 : vector<1x1x8x128xbf16> to vector<8x128xbf16>
    %157 = arith.maximumf %154, %156 : vector<8x128xbf16>
    %c0_93 = arith.constant 0 : index
    %c14 = arith.constant 14 : index
    %c0_94 = arith.constant 0 : index
    %c0_95 = arith.constant 0 : index
    %158 = vector.load %arg5[%c0_93, %c14, %c0_94, %c0_95] : memref<1x22x8x128xbf16, #tpu.memory_space<vmem>>, vector<1x1x8x128xbf16>
    %159 = vector.shape_cast %158 : vector<1x1x8x128xbf16> to vector<8x128xbf16>
    %160 = arith.maximumf %157, %159 : vector<8x128xbf16>
    %c0_96 = arith.constant 0 : index
    %c15 = arith.constant 15 : index
    %c0_97 = arith.constant 0 : index
    %c0_98 = arith.constant 0 : index
    %161 = vector.load %arg5[%c0_96, %c15, %c0_97, %c0_98] : memref<1x22x8x128xbf16, #tpu.memory_space<vmem>>, vector<1x1x8x128xbf16>
    %162 = vector.shape_cast %161 : vector<1x1x8x128xbf16> to vector<8x128xbf16>
    %163 = arith.maximumf %160, %162 : vector<8x128xbf16>
    %c0_99 = arith.constant 0 : index
    %c16 = arith.constant 16 : index
    %c0_100 = arith.constant 0 : index
    %c0_101 = arith.constant 0 : index
    %164 = vector.load %arg5[%c0_99, %c16, %c0_100, %c0_101] : memref<1x22x8x128xbf16, #tpu.memory_space<vmem>>, vector<1x1x8x128xbf16>
    %165 = vector.shape_cast %164 : vector<1x1x8x128xbf16> to vector<8x128xbf16>
    %166 = arith.maximumf %163, %165 : vector<8x128xbf16>
    %c0_102 = arith.constant 0 : index
    %c17 = arith.constant 17 : index
    %c0_103 = arith.constant 0 : index
    %c0_104 = arith.constant 0 : index
    %167 = vector.load %arg5[%c0_102, %c17, %c0_103, %c0_104] : memref<1x22x8x128xbf16, #tpu.memory_space<vmem>>, vector<1x1x8x128xbf16>
    %168 = vector.shape_cast %167 : vector<1x1x8x128xbf16> to vector<8x128xbf16>
    %169 = arith.maximumf %166, %168 : vector<8x128xbf16>
    %c0_105 = arith.constant 0 : index
    %c18 = arith.constant 18 : index
    %c0_106 = arith.constant 0 : index
    %c0_107 = arith.constant 0 : index
    %170 = vector.load %arg5[%c0_105, %c18, %c0_106, %c0_107] : memref<1x22x8x128xbf16, #tpu.memory_space<vmem>>, vector<1x1x8x128xbf16>
    %171 = vector.shape_cast %170 : vector<1x1x8x128xbf16> to vector<8x128xbf16>
    %172 = arith.maximumf %169, %171 : vector<8x128xbf16>
    %c0_108 = arith.constant 0 : index
    %c19 = arith.constant 19 : index
    %c0_109 = arith.constant 0 : index
    %c0_110 = arith.constant 0 : index
    %173 = vector.load %arg5[%c0_108, %c19, %c0_109, %c0_110] : memref<1x22x8x128xbf16, #tpu.memory_space<vmem>>, vector<1x1x8x128xbf16>
    %174 = vector.shape_cast %173 : vector<1x1x8x128xbf16> to vector<8x128xbf16>
    %175 = arith.maximumf %172, %174 : vector<8x128xbf16>
    %c0_111 = arith.constant 0 : index
    %c20 = arith.constant 20 : index
    %c0_112 = arith.constant 0 : index
    %c0_113 = arith.constant 0 : index
    %176 = vector.load %arg5[%c0_111, %c20, %c0_112, %c0_113] : memref<1x22x8x128xbf16, #tpu.memory_space<vmem>>, vector<1x1x8x128xbf16>
    %177 = vector.shape_cast %176 : vector<1x1x8x128xbf16> to vector<8x128xbf16>
    %178 = arith.maximumf %175, %177 : vector<8x128xbf16>
    %c0_114 = arith.constant 0 : index
    %c21 = arith.constant 21 : index
    %c0_115 = arith.constant 0 : index
    %c0_116 = arith.constant 0 : index
    %179 = vector.load %arg5[%c0_114, %c21, %c0_115, %c0_116] : memref<1x22x8x128xbf16, #tpu.memory_space<vmem>>, vector<1x1x8x128xbf16>
    %180 = vector.shape_cast %179 : vector<1x1x8x128xbf16> to vector<8x128xbf16>
    %181 = arith.maximumf %178, %180 : vector<8x128xbf16>
    %182 = arith.extf %181 : vector<8x128xbf16> to vector<8x128xf32>
    %cst_117 = arith.constant 0.000000e+00 : f32
    %183 = vector.broadcast %cst_117 : f32 to vector<8x128xf32>
    %cst_118 = arith.constant 0.000000e+00 : f32
    %184 = vector.broadcast %cst_118 : f32 to vector<8x128xf32>
    %c0_119 = arith.constant 0 : index
    %c11_120 = arith.constant 11 : index
    %c0_121 = arith.constant 0 : index
    %c0_122 = arith.constant 0 : index
    %185 = vector.load %arg5[%c0_119, %c11_120, %c0_121, %c0_122] : memref<1x22x8x128xbf16, #tpu.memory_space<vmem>>, vector<1x1x8x128xbf16>
    %186 = vector.shape_cast %185 : vector<1x1x8x128xbf16> to vector<8x128xbf16>
    %187 = arith.extf %186 : vector<8x128xbf16> to vector<8x128xf32>
    %188 = arith.subf %187, %182 : vector<8x128xf32>
    %189 = math.exp %188 : vector<8x128xf32>
    %190 = arith.addf %183, %189 : vector<8x128xf32>
    %c0_i32_123 = arith.constant 0 : i32
    %191 = vector.broadcast %c0_i32_123 : i32 to vector<8x128xi32>
    %192 = arith.cmpi eq, %6, %191 : vector<8x128xi32>
    %193 = arith.select %192, %188, %184 : vector<8x128xi1>, vector<8x128xf32>
    %c0_124 = arith.constant 0 : index
    %c12_125 = arith.constant 12 : index
    %c0_126 = arith.constant 0 : index
    %c0_127 = arith.constant 0 : index
    %194 = vector.load %arg5[%c0_124, %c12_125, %c0_126, %c0_127] : memref<1x22x8x128xbf16, #tpu.memory_space<vmem>>, vector<1x1x8x128xbf16>
    %195 = vector.shape_cast %194 : vector<1x1x8x128xbf16> to vector<8x128xbf16>
    %196 = arith.extf %195 : vector<8x128xbf16> to vector<8x128xf32>
    %197 = arith.subf %196, %182 : vector<8x128xf32>
    %198 = math.exp %197 : vector<8x128xf32>
    %199 = arith.addf %190, %198 : vector<8x128xf32>
    %c1_i32_128 = arith.constant 1 : i32
    %200 = vector.broadcast %c1_i32_128 : i32 to vector<8x128xi32>
    %201 = arith.cmpi eq, %6, %200 : vector<8x128xi32>
    %202 = arith.select %201, %197, %193 : vector<8x128xi1>, vector<8x128xf32>
    %c0_129 = arith.constant 0 : index
    %c13_130 = arith.constant 13 : index
    %c0_131 = arith.constant 0 : index
    %c0_132 = arith.constant 0 : index
    %203 = vector.load %arg5[%c0_129, %c13_130, %c0_131, %c0_132] : memref<1x22x8x128xbf16, #tpu.memory_space<vmem>>, vector<1x1x8x128xbf16>
    %204 = vector.shape_cast %203 : vector<1x1x8x128xbf16> to vector<8x128xbf16>
    %205 = arith.extf %204 : vector<8x128xbf16> to vector<8x128xf32>
    %206 = arith.subf %205, %182 : vector<8x128xf32>
    %207 = math.exp %206 : vector<8x128xf32>
    %208 = arith.addf %199, %207 : vector<8x128xf32>
    %c2_i32_133 = arith.constant 2 : i32
    %209 = vector.broadcast %c2_i32_133 : i32 to vector<8x128xi32>
    %210 = arith.cmpi eq, %6, %209 : vector<8x128xi32>
    %211 = arith.select %210, %206, %202 : vector<8x128xi1>, vector<8x128xf32>
    %c0_134 = arith.constant 0 : index
    %c14_135 = arith.constant 14 : index
    %c0_136 = arith.constant 0 : index
    %c0_137 = arith.constant 0 : index
    %212 = vector.load %arg5[%c0_134, %c14_135, %c0_136, %c0_137] : memref<1x22x8x128xbf16, #tpu.memory_space<vmem>>, vector<1x1x8x128xbf16>
    %213 = vector.shape_cast %212 : vector<1x1x8x128xbf16> to vector<8x128xbf16>
    %214 = arith.extf %213 : vector<8x128xbf16> to vector<8x128xf32>
    %215 = arith.subf %214, %182 : vector<8x128xf32>
    %216 = math.exp %215 : vector<8x128xf32>
    %217 = arith.addf %208, %216 : vector<8x128xf32>
    %c3_i32_138 = arith.constant 3 : i32
    %218 = vector.broadcast %c3_i32_138 : i32 to vector<8x128xi32>
    %219 = arith.cmpi eq, %6, %218 : vector<8x128xi32>
    %220 = arith.select %219, %215, %211 : vector<8x128xi1>, vector<8x128xf32>
    %c0_139 = arith.constant 0 : index
    %c15_140 = arith.constant 15 : index
    %c0_141 = arith.constant 0 : index
    %c0_142 = arith.constant 0 : index
    %221 = vector.load %arg5[%c0_139, %c15_140, %c0_141, %c0_142] : memref<1x22x8x128xbf16, #tpu.memory_space<vmem>>, vector<1x1x8x128xbf16>
    %222 = vector.shape_cast %221 : vector<1x1x8x128xbf16> to vector<8x128xbf16>
    %223 = arith.extf %222 : vector<8x128xbf16> to vector<8x128xf32>
    %224 = arith.subf %223, %182 : vector<8x128xf32>
    %225 = math.exp %224 : vector<8x128xf32>
    %226 = arith.addf %217, %225 : vector<8x128xf32>
    %c4_i32_143 = arith.constant 4 : i32
    %227 = vector.broadcast %c4_i32_143 : i32 to vector<8x128xi32>
    %228 = arith.cmpi eq, %6, %227 : vector<8x128xi32>
    %229 = arith.select %228, %224, %220 : vector<8x128xi1>, vector<8x128xf32>
    %c0_144 = arith.constant 0 : index
    %c16_145 = arith.constant 16 : index
    %c0_146 = arith.constant 0 : index
    %c0_147 = arith.constant 0 : index
    %230 = vector.load %arg5[%c0_144, %c16_145, %c0_146, %c0_147] : memref<1x22x8x128xbf16, #tpu.memory_space<vmem>>, vector<1x1x8x128xbf16>
    %231 = vector.shape_cast %230 : vector<1x1x8x128xbf16> to vector<8x128xbf16>
    %232 = arith.extf %231 : vector<8x128xbf16> to vector<8x128xf32>
    %233 = arith.subf %232, %182 : vector<8x128xf32>
    %234 = math.exp %233 : vector<8x128xf32>
    %235 = arith.addf %226, %234 : vector<8x128xf32>
    %c5_i32_148 = arith.constant 5 : i32
    %236 = vector.broadcast %c5_i32_148 : i32 to vector<8x128xi32>
    %237 = arith.cmpi eq, %6, %236 : vector<8x128xi32>
    %238 = arith.select %237, %233, %229 : vector<8x128xi1>, vector<8x128xf32>
    %c0_149 = arith.constant 0 : index
    %c17_150 = arith.constant 17 : index
    %c0_151 = arith.constant 0 : index
    %c0_152 = arith.constant 0 : index
    %239 = vector.load %arg5[%c0_149, %c17_150, %c0_151, %c0_152] : memref<1x22x8x128xbf16, #tpu.memory_space<vmem>>, vector<1x1x8x128xbf16>
    %240 = vector.shape_cast %239 : vector<1x1x8x128xbf16> to vector<8x128xbf16>
    %241 = arith.extf %240 : vector<8x128xbf16> to vector<8x128xf32>
    %242 = arith.subf %241, %182 : vector<8x128xf32>
    %243 = math.exp %242 : vector<8x128xf32>
    %244 = arith.addf %235, %243 : vector<8x128xf32>
    %c6_i32_153 = arith.constant 6 : i32
    %245 = vector.broadcast %c6_i32_153 : i32 to vector<8x128xi32>
    %246 = arith.cmpi eq, %6, %245 : vector<8x128xi32>
    %247 = arith.select %246, %242, %238 : vector<8x128xi1>, vector<8x128xf32>
    %c0_154 = arith.constant 0 : index
    %c18_155 = arith.constant 18 : index
    %c0_156 = arith.constant 0 : index
    %c0_157 = arith.constant 0 : index
    %248 = vector.load %arg5[%c0_154, %c18_155, %c0_156, %c0_157] : memref<1x22x8x128xbf16, #tpu.memory_space<vmem>>, vector<1x1x8x128xbf16>
    %249 = vector.shape_cast %248 : vector<1x1x8x128xbf16> to vector<8x128xbf16>
    %250 = arith.extf %249 : vector<8x128xbf16> to vector<8x128xf32>
    %251 = arith.subf %250, %182 : vector<8x128xf32>
    %252 = math.exp %251 : vector<8x128xf32>
    %253 = arith.addf %244, %252 : vector<8x128xf32>
    %c7_i32_158 = arith.constant 7 : i32
    %254 = vector.broadcast %c7_i32_158 : i32 to vector<8x128xi32>
    %255 = arith.cmpi eq, %6, %254 : vector<8x128xi32>
    %256 = arith.select %255, %251, %247 : vector<8x128xi1>, vector<8x128xf32>
    %c0_159 = arith.constant 0 : index
    %c19_160 = arith.constant 19 : index
    %c0_161 = arith.constant 0 : index
    %c0_162 = arith.constant 0 : index
    %257 = vector.load %arg5[%c0_159, %c19_160, %c0_161, %c0_162] : memref<1x22x8x128xbf16, #tpu.memory_space<vmem>>, vector<1x1x8x128xbf16>
    %258 = vector.shape_cast %257 : vector<1x1x8x128xbf16> to vector<8x128xbf16>
    %259 = arith.extf %258 : vector<8x128xbf16> to vector<8x128xf32>
    %260 = arith.subf %259, %182 : vector<8x128xf32>
    %261 = math.exp %260 : vector<8x128xf32>
    %262 = arith.addf %253, %261 : vector<8x128xf32>
    %c8_i32_163 = arith.constant 8 : i32
    %263 = vector.broadcast %c8_i32_163 : i32 to vector<8x128xi32>
    %264 = arith.cmpi eq, %6, %263 : vector<8x128xi32>
    %265 = arith.select %264, %260, %256 : vector<8x128xi1>, vector<8x128xf32>
    %c0_164 = arith.constant 0 : index
    %c20_165 = arith.constant 20 : index
    %c0_166 = arith.constant 0 : index
    %c0_167 = arith.constant 0 : index
    %266 = vector.load %arg5[%c0_164, %c20_165, %c0_166, %c0_167] : memref<1x22x8x128xbf16, #tpu.memory_space<vmem>>, vector<1x1x8x128xbf16>
    %267 = vector.shape_cast %266 : vector<1x1x8x128xbf16> to vector<8x128xbf16>
    %268 = arith.extf %267 : vector<8x128xbf16> to vector<8x128xf32>
    %269 = arith.subf %268, %182 : vector<8x128xf32>
    %270 = math.exp %269 : vector<8x128xf32>
    %271 = arith.addf %262, %270 : vector<8x128xf32>
    %c9_i32_168 = arith.constant 9 : i32
    %272 = vector.broadcast %c9_i32_168 : i32 to vector<8x128xi32>
    %273 = arith.cmpi eq, %6, %272 : vector<8x128xi32>
    %274 = arith.select %273, %269, %265 : vector<8x128xi1>, vector<8x128xf32>
    %c0_169 = arith.constant 0 : index
    %c21_170 = arith.constant 21 : index
    %c0_171 = arith.constant 0 : index
    %c0_172 = arith.constant 0 : index
    %275 = vector.load %arg5[%c0_169, %c21_170, %c0_171, %c0_172] : memref<1x22x8x128xbf16, #tpu.memory_space<vmem>>, vector<1x1x8x128xbf16>
    %276 = vector.shape_cast %275 : vector<1x1x8x128xbf16> to vector<8x128xbf16>
    %277 = arith.extf %276 : vector<8x128xbf16> to vector<8x128xf32>
    %278 = arith.subf %277, %182 : vector<8x128xf32>
    %279 = math.exp %278 : vector<8x128xf32>
    %280 = arith.addf %271, %279 : vector<8x128xf32>
    %c10_i32_173 = arith.constant 10 : i32
    %281 = vector.broadcast %c10_i32_173 : i32 to vector<8x128xi32>
    %282 = arith.cmpi eq, %6, %281 : vector<8x128xi32>
    %283 = arith.select %282, %278, %274 : vector<8x128xi1>, vector<8x128xf32>
    %284 = math.log %280 : vector<8x128xf32>
    %285 = arith.subf %284, %283 : vector<8x128xf32>
    %286 = arith.mulf %285, %12 : vector<8x128xf32>
    %c0_174 = arith.constant 0 : index
    %c0_175 = arith.constant 0 : index
    %c0_176 = arith.constant 0 : index
    %287 = vector.load %arg6[%c0_174, %c0_175, %c0_176] : memref<1x8x128xbf16, #tpu.memory_space<vmem>>, vector<1x8x128xbf16>
    %288 = vector.shape_cast %287 : vector<1x8x128xbf16> to vector<8x128xbf16>
    %289 = arith.extf %288 : vector<8x128xbf16> to vector<8x128xf32>
    %c1_i32_177 = arith.constant 1 : i32
    %290 = vector.broadcast %c1_i32_177 : i32 to vector<8x128xi32>
    %291 = arith.cmpi eq, %8, %290 : vector<8x128xi32>
    %cst_178 = arith.constant 0.000000e+00 : f32
    %292 = vector.broadcast %cst_178 : f32 to vector<8x128xf32>
    %293 = arith.subf %292, %289 : vector<8x128xf32>
    %294 = arith.select %291, %293, %289 : vector<8x128xi1>, vector<8x128xf32>
    %cst_179 = arith.constant 0.000000e+00 : f32
    %295 = vector.broadcast %cst_179 : f32 to vector<8x128xf32>
    %296 = arith.maximumf %294, %295 : vector<8x128xf32>
    %297 = math.absf %294 : vector<8x128xf32>
    %cst_180 = arith.constant 0.000000e+00 : f32
    %298 = vector.broadcast %cst_180 : f32 to vector<8x128xf32>
    %299 = arith.subf %298, %297 : vector<8x128xf32>
    %300 = math.exp %299 : vector<8x128xf32>
    %cst_181 = arith.constant 1.000000e+00 : f32
    %301 = vector.broadcast %cst_181 : f32 to vector<8x128xf32>
    %302 = arith.addf %301, %300 : vector<8x128xf32>
    %303 = math.log %302 : vector<8x128xf32>
    %304 = arith.addf %296, %303 : vector<8x128xf32>
    %c1_i32_182 = arith.constant 1 : i32
    %305 = vector.broadcast %c1_i32_182 : i32 to vector<8x128xi32>
    %306 = arith.cmpi eq, %8, %305 : vector<8x128xi32>
    %c1_183 = arith.constant 1 : index
    %307 = memref.load %arg3[%c1_183] : memref<2xf32, #tpu.memory_space<smem>>
    %c0_i32_184 = arith.constant 0 : i32
    %308 = vector.broadcast %c0_i32_184 : i32 to vector<8x128xi32>
    %309 = arith.cmpi eq, %8, %308 : vector<8x128xi32>
    %c0_185 = arith.constant 0 : index
    %310 = memref.load %arg3[%c0_185] : memref<2xf32, #tpu.memory_space<smem>>
    %cst_186 = arith.constant 0.000000e+00 : f32
    %311 = vector.broadcast %310 : f32 to vector<8x128xf32>
    %312 = vector.broadcast %cst_186 : f32 to vector<8x128xf32>
    %313 = arith.select %309, %311, %312 : vector<8x128xi1>, vector<8x128xf32>
    %314 = vector.broadcast %307 : f32 to vector<8x128xf32>
    %315 = arith.select %306, %314, %313 : vector<8x128xi1>, vector<8x128xf32>
    %316 = arith.index_cast %arg0 : i32 to index
    %317 = memref.load %arg4[%316] : memref<2xf32, #tpu.memory_space<smem>>
    %cst_187 = arith.constant 1.000000e+00 : f32
    %318 = arith.addf %317, %cst_187 : f32
    %cst_188 = arith.constant 1.000000e+00 : f32
    %319 = arith.divf %cst_188, %318 : f32
    %c1_i32_189 = arith.constant 1 : i32
    %320 = vector.broadcast %c1_i32_189 : i32 to vector<8x128xi32>
    %321 = arith.cmpi eq, %8, %320 : vector<8x128xi32>
    %322 = arith.extui %321 : vector<8x128xi1> to vector<8x128xi32>
    %323 = arith.sitofp %322 : vector<8x128xi32> to vector<8x128xf32>
    %324 = arith.mulf %149, %323 : vector<8x128xf32>
    %325 = vector.broadcast %319 : f32 to vector<8x128xf32>
    %326 = arith.mulf %324, %325 : vector<8x128xf32>
    %327 = arith.mulf %315, %304 : vector<8x128xf32>
    %328 = tpu.iota {dimensions = array<i32: 2>} : vector<1x1x8x128xi32>
    %cst_190 = arith.constant 0.000000e+00 : f32
    %329 = vector.broadcast %cst_190 : f32 to vector<1x1x8x128xf32>
    %cst_191 = arith.constant dense<0.000000e+00> : vector<128xf32>
    %330 = vector.multi_reduction <add>, %149, %cst_191 [0] : vector<8x128xf32> to vector<128xf32>
    %331 = vector.shape_cast %330 : vector<128xf32> to vector<1x128xf32>
    %c0_i32_192 = arith.constant 0 : i32
    %332 = vector.broadcast %c0_i32_192 : i32 to vector<1x1x8x128xi32>
    %333 = arith.cmpi eq, %328, %332 : vector<1x1x8x128xi32>
    %334 = vector.shape_cast %331 : vector<1x128xf32> to vector<1x1x1x128xf32>
    %335 = vector.shape_cast %334 : vector<1x1x1x128xf32> to vector<1x1x1x128xf32>
    %336 = vector.broadcast %335 : vector<1x1x1x128xf32> to vector<1x1x8x128xf32>
    %337 = arith.select %333, %336, %329 : vector<1x1x8x128xi1>, vector<1x1x8x128xf32>
    %cst_193 = arith.constant dense<0.000000e+00> : vector<128xf32>
    %338 = vector.multi_reduction <add>, %12, %cst_193 [0] : vector<8x128xf32> to vector<128xf32>
    %339 = vector.shape_cast %338 : vector<128xf32> to vector<1x128xf32>
    %c1_i32_194 = arith.constant 1 : i32
    %340 = vector.broadcast %c1_i32_194 : i32 to vector<1x1x8x128xi32>
    %341 = arith.cmpi eq, %328, %340 : vector<1x1x8x128xi32>
    %342 = vector.shape_cast %339 : vector<1x128xf32> to vector<1x1x1x128xf32>
    %343 = vector.shape_cast %342 : vector<1x1x1x128xf32> to vector<1x1x1x128xf32>
    %344 = vector.broadcast %343 : vector<1x1x1x128xf32> to vector<1x1x8x128xf32>
    %345 = arith.select %341, %344, %337 : vector<1x1x8x128xi1>, vector<1x1x8x128xf32>
    %cst_195 = arith.constant dense<0.000000e+00> : vector<128xf32>
    %346 = vector.multi_reduction <add>, %286, %cst_195 [0] : vector<8x128xf32> to vector<128xf32>
    %347 = vector.shape_cast %346 : vector<128xf32> to vector<1x128xf32>
    %c2_i32_196 = arith.constant 2 : i32
    %348 = vector.broadcast %c2_i32_196 : i32 to vector<1x1x8x128xi32>
    %349 = arith.cmpi eq, %328, %348 : vector<1x1x8x128xi32>
    %350 = vector.shape_cast %347 : vector<1x128xf32> to vector<1x1x1x128xf32>
    %351 = vector.shape_cast %350 : vector<1x1x1x128xf32> to vector<1x1x1x128xf32>
    %352 = vector.broadcast %351 : vector<1x1x1x128xf32> to vector<1x1x8x128xf32>
    %353 = arith.select %349, %352, %345 : vector<1x1x8x128xi1>, vector<1x1x8x128xf32>
    %cst_197 = arith.constant dense<0.000000e+00> : vector<128xf32>
    %354 = vector.multi_reduction <add>, %327, %cst_197 [0] : vector<8x128xf32> to vector<128xf32>
    %355 = vector.shape_cast %354 : vector<128xf32> to vector<1x128xf32>
    %c3_i32_198 = arith.constant 3 : i32
    %356 = vector.broadcast %c3_i32_198 : i32 to vector<1x1x8x128xi32>
    %357 = arith.cmpi eq, %328, %356 : vector<1x1x8x128xi32>
    %358 = vector.shape_cast %355 : vector<1x128xf32> to vector<1x1x1x128xf32>
    %359 = vector.shape_cast %358 : vector<1x1x1x128xf32> to vector<1x1x1x128xf32>
    %360 = vector.broadcast %359 : vector<1x1x1x128xf32> to vector<1x1x8x128xf32>
    %361 = arith.select %357, %360, %353 : vector<1x1x8x128xi1>, vector<1x1x8x128xf32>
    %cst_199 = arith.constant dense<0.000000e+00> : vector<128xf32>
    %362 = vector.multi_reduction <add>, %315, %cst_199 [0] : vector<8x128xf32> to vector<128xf32>
    %363 = vector.shape_cast %362 : vector<128xf32> to vector<1x128xf32>
    %c4_i32_200 = arith.constant 4 : i32
    %364 = vector.broadcast %c4_i32_200 : i32 to vector<1x1x8x128xi32>
    %365 = arith.cmpi eq, %328, %364 : vector<1x1x8x128xi32>
    %366 = vector.shape_cast %363 : vector<1x128xf32> to vector<1x1x1x128xf32>
    %367 = vector.shape_cast %366 : vector<1x1x1x128xf32> to vector<1x1x1x128xf32>
    %368 = vector.broadcast %367 : vector<1x1x1x128xf32> to vector<1x1x8x128xf32>
    %369 = arith.select %365, %368, %361 : vector<1x1x8x128xi1>, vector<1x1x8x128xf32>
    %cst_201 = arith.constant dense<0.000000e+00> : vector<128xf32>
    %370 = vector.multi_reduction <add>, %326, %cst_201 [0] : vector<8x128xf32> to vector<128xf32>
    %371 = vector.shape_cast %370 : vector<128xf32> to vector<1x128xf32>
    %c5_i32_202 = arith.constant 5 : i32
    %372 = vector.broadcast %c5_i32_202 : i32 to vector<1x1x8x128xi32>
    %373 = arith.cmpi eq, %328, %372 : vector<1x1x8x128xi32>
    %374 = vector.shape_cast %371 : vector<1x128xf32> to vector<1x1x1x128xf32>
    %375 = vector.shape_cast %374 : vector<1x1x1x128xf32> to vector<1x1x1x128xf32>
    %376 = vector.broadcast %375 : vector<1x1x1x128xf32> to vector<1x1x8x128xf32>
    %377 = arith.select %373, %376, %369 : vector<1x1x8x128xi1>, vector<1x1x8x128xf32>
    %c0_203 = arith.constant 0 : index
    %c0_204 = arith.constant 0 : index
    %c0_205 = arith.constant 0 : index
    %c0_206 = arith.constant 0 : index
    %378 = vector.load %arg8[%c0_203, %c0_204, %c0_205, %c0_206] : memref<1x1x8x128xf32, #tpu.memory_space<vmem>>, vector<1x1x8x128xf32>
    %379 = arith.addf %378, %377 : vector<1x1x8x128xf32>
    %c0_207 = arith.constant 0 : index
    %c0_208 = arith.constant 0 : index
    %c0_209 = arith.constant 0 : index
    %c0_210 = arith.constant 0 : index
    %380 = vector.load %arg8[%c0_207, %c0_208, %c0_209, %c0_210] : memref<1x1x8x128xf32, #tpu.memory_space<vmem>>, vector<1x1x8x128xf32>
    tpu.vector_store %arg8[%c0_207, %c0_208, %c0_209, %c0_210], %379 {strides = array<i32>} : memref<1x1x8x128xf32, #tpu.memory_space<vmem>>, vector<1x1x8x128xf32>,
    return
  }
  func.func @transform_0(%arg0: i32, %arg1: i32, %arg2: i32) -> i32 {
    %c0_i32 = arith.constant 0 : i32
    %c0_i32_0 = arith.constant 0 : i32
    return %c0_i32 : i32
  }
  func.func @transform_1(%arg0: i32, %arg1: i32, %arg2: i32) -> i32 {
    %c0_i32 = arith.constant 0 : i32
    %c0_i32_0 = arith.constant 0 : i32
    return %c0_i32 : i32
  }
  func.func @transform_2(%arg0: i32, %arg1: i32, %arg2: i32) -> (i32, i32, i32, i32) {
    %c1_i32 = arith.constant 1 : i32
    %0 = arith.muli %arg1, %c1_i32 : i32
    %1 = arith.addi %0, %arg2 : i32
    %c0_i32 = arith.constant 0 : i32
    %c0_i32_0 = arith.constant 0 : i32
    %c0_i32_1 = arith.constant 0 : i32
    return %arg0, %c0_i32, %1, %c0_i32_0 : i32, i32, i32, i32
  }
  func.func @transform_3(%arg0: i32, %arg1: i32, %arg2: i32) -> (i32, i32, i32) {
    %c1_i32 = arith.constant 1 : i32
    %0 = arith.muli %arg1, %c1_i32 : i32
    %1 = arith.addi %0, %arg2 : i32
    %c0_i32 = arith.constant 0 : i32
    %c0_i32_0 = arith.constant 0 : i32
    return %arg0, %1, %c0_i32 : i32, i32, i32
  }
  func.func @transform_4(%arg0: i32, %arg1: i32, %arg2: i32) -> (i32, i32, i32) {
    %c1_i32 = arith.constant 1 : i32
    %0 = arith.muli %arg1, %c1_i32 : i32
    %1 = arith.addi %0, %arg2 : i32
    %c0_i32 = arith.constant 0 : i32
    %c0_i32_0 = arith.constant 0 : i32
    return %arg0, %1, %c0_i32 : i32, i32, i32
  }
  func.func @transform_5(%arg0: i32, %arg1: i32, %arg2: i32) -> (i32, i32, i32, i32) {
    %c0_i32 = arith.constant 0 : i32
    %c0_i32_0 = arith.constant 0 : i32
    %c0_i32_1 = arith.constant 0 : i32
    return %arg0, %arg1, %c0_i32, %c0_i32_0 : i32, i32, i32, i32
  }
}

</mosaic_0001>

<llo_original>
// kernel: tpu_custom_call.1
$region0: #{tpu_custom_call.1}
  #allocation0 [shape = 'u32[]', space=smem, size = 0x4, offset = 0x4, fixed_abs, tag = 'smem constant byte address 0x4 - core index']
  #allocation1 [shape = 'u32[144,128]{1,0:T(1,128)}', space=vmem, size = 0x12000, scoped, tag = 'internal scratch']
  %s0 = inlined_call_operand.hbm [shape: f32[2], index: 0, kind: input, shape index: {}]
  %s1 = inlined_call_operand.vmem [shape: f32[2], index: 1, kind: input, shape index: {}]
  %s2 = inlined_call_operand.hbm [shape: bf16[2,22,16,128], index: 2, kind: input, shape index: {}]
  %s3 = inlined_call_operand.hbm [shape: bf16[2,16,128], index: 3, kind: input, shape index: {}]
  %s4 = inlined_call_operand.hbm [shape: s32[2,16,128], index: 4, kind: input, shape index: {}]
  %s5 = inlined_call_operand.hbm [shape: f32[2,2,8,128], index: 5, kind: output, shape index: {}]
  %s6 = sld [smem:[#allocation0]]
  $region77: #{tpu_custom_call.1} parent=0
    _
  %s8 = ssub.s32 1, %s6
  %s9 = scalar_select 0, %s8, %s6
  $region1: #{tpu_custom_call.1} parent=0
    #allocation2 [shape = 'u8[512]{0}', space=smem, size = 0x200, scoped, tag = 'input window, operand 0, single buffered']
    #allocation3 [shape = 's32[2]{0}', space=sflag, size = 0x8, scoped, tag = 'scoped memory for tpu_custom_call.1']
    #allocation4 [shape = 's32[2]{0}', space=sflag, size = 0x8, scoped, tag = 'scoped memory for tpu_custom_call.1']
    #allocation5 [shape = 's32[2]{0}', space=sflag, size = 0x8, scoped, tag = 'scoped memory for tpu_custom_call.1']
    #allocation6 [shape = 's32[2]{0}', space=sflag, size = 0x8, scoped, tag = 'scoped memory for tpu_custom_call.1']
    #allocation7 [shape = 'u8[512]{0}', space=smem, size = 0x200, scoped, tag = 'input window, operand 1, single buffered']
    #allocation8 [shape = 'u8[90112]{0}', space=vmem, size = 0x16000, scoped, tag = 'input window, operand 2']
    #allocation9 [shape = 'u8[4096]{0}', space=vmem, size = 0x1000, scoped, tag = 'input window, operand 3']
    #allocation10 [shape = 's32[2]{0}', space=sflag, size = 0x8, scoped, tag = 'scoped memory for tpu_custom_call.1']
    #allocation11 [shape = 'u8[8192]{0}', space=vmem, size = 0x2000, scoped, tag = 'input window, operand 4']
    #allocation12 [shape = 'u8[8192]{0}', space=vmem, size = 0x2000, scoped, tag = 'output window, operand 0']
    %10 = vsyncpa [#allocation5], 0
    %11 = vsyncpa [#allocation6], 0
    %12 = vsyncpa [#allocation3], 0
    %s13 = scalar_lea.sflag [#allocation3], 1
    %14 = vsyncpa %s13, 0
    %15 = vsyncpa [#allocation10], 0
    %s16 = scalar_lea.sflag [#allocation10], 1
    %17 = vsyncpa %s16, 0
    %18 = vsyncpa [#allocation4], 0
    %s19 = scalar_lea.sflag [#allocation4], 1
    %20 = vsyncpa %s19, 0
    loop: start=0, step=1, limit=6
    $region2: #{tpu_custom_call.1} parent=1 // loop_pre_header
      _
    $region3: #{tpu_custom_call.1} parent=1 // loop_header
      %s22 = sphi 0, %s26
      %p23 = scmp.ge.s32.totalorder %s22, 6
      %s29 = sphi 0, %s48
      %s30 = sphi 0, %s44
      %s31 = sphi 0, %s40
      %s32 = sphi 0, %s29
      %s33 = sphi 0, %s30
      %s34 = sphi 0, %s31
      %s35 = sphi 0, %s32
      %s36 = sphi 0, %s33
      %s37 = sphi 0, %s34
      %s49 = sphi 0, %s49
      %s51 = sphi 0, %s49
      %s52 = sphi 0, %s51
      %s66 = sphi 0, %s52
      %s70 = sphi 0, %s70
      %s72 = sphi 0, %s70
      %s73 = sphi 0, %s72
      %s87 = sphi 0, %s73
      %s97 = sphi 0, %s99
      %s100 = sphi 0, %s97
      %s101 = sphi 0, %s100
      %s117 = sphi 0, %s101
      %s127 = sphi 0, %s129
      %s130 = sphi 0, %s127
      %s131 = sphi 0, %s130
      %s147 = sphi 0, %s131
      %s157 = sphi 0, %s159
      %s160 = sphi 0, %s157
      %s161 = sphi 0, %s160
      %s177 = sphi 0, %s161
      %s185 = sphi 0, %s187
      %s188 = sphi 0, %s185
      %s189 = sphi 0, %s188
      %s205 = sphi 0, %s189
    $region4: #{tpu_custom_call.1} parent=1 // loop_header_branch
      %25 = sbr.rel (%p23) target = $region8
    $region5: #{tpu_custom_call.1} parent=1 // loop_body
      %s27 = ssub.s32 %s22, 1
      %s28 = ssub.s32 %s22, 2
      %s38 = sadd.s32 1, %s31
      %p39 = scmp.ge.s32.totalorder %s38, 1
      %s40 = scalar_select %p39, 0, %s38
      %s41 = sadd.s32 1, %s30
      %s42 = scalar_select %p39, %s41, %s30
      %p43 = scmp.ge.s32.totalorder %s42, 2
      %s44 = scalar_select %p43, 0, %s42
      %s45 = sadd.s32 1, %s29
      %s46 = scalar_select %p43, %s45, %s29
      %p47 = scmp.ge.s32.totalorder %s46, 2
      %s48 = scalar_select %p47, 0, %s46
      %s50 = sadd.s32 %s49, 1
      %p53 = scmp.eq.s32.totalorder %s22, 3
      %p54 = scmp.ne.s32.totalorder %s49, %s51
      %p55 = scmp.eq.s32.totalorder %s22, 0
      %p56 = por %p54, %p55
      %p57 = scmp.ne.s32.totalorder %s49, %s51
      %p58 = scmp.eq.s32.totalorder %s27, 3
      %p59 = por %p57, %p58
      %p60 = scmp.ne.s32.totalorder %s51, %s52
      %p61 = scmp.eq.s32.totalorder %s27, 0
      %p62 = por %p60, %p61
      %p63 = scmp.ne.s32.totalorder %s51, %s52
      %p64 = scmp.eq.s32.totalorder %s28, 3
      %p65 = por %p63, %p64
      %p67 = scmp.ne.s32.totalorder %s52, %s66
      %p68 = scmp.eq.s32.totalorder %s28, 0
      %p69 = por %p67, %p68
      %s71 = sadd.s32 %s70, 1
      %p74 = scmp.eq.s32.totalorder %s22, 3
      %p75 = scmp.ne.s32.totalorder %s70, %s72
      %p76 = scmp.eq.s32.totalorder %s22, 0
      %p77 = por %p75, %p76
      %p78 = scmp.ne.s32.totalorder %s70, %s72
      %p79 = scmp.eq.s32.totalorder %s27, 3
      %p80 = por %p78, %p79
      %p81 = scmp.ne.s32.totalorder %s72, %s73
      %p82 = scmp.eq.s32.totalorder %s27, 0
      %p83 = por %p81, %p82
      %p84 = scmp.ne.s32.totalorder %s72, %s73
      %p85 = scmp.eq.s32.totalorder %s28, 3
      %p86 = por %p84, %p85
      %p88 = scmp.ne.s32.totalorder %s73, %s87
      %p89 = scmp.eq.s32.totalorder %s28, 0
      %p90 = por %p88, %p89
      %s91 = sadd.s32 %s30, %s31
      %s92 = sadd.s32 %s44, %s40
      %s93 = ssub.s32 %s29, %s48
      %s94 = ssub.s32 %s91, %s92
      %s95 = sor.u32 %s93, %s94
      %p96 = scmp.eq.s32.totalorder %s95, 0
      %s98 = sadd.s32 %s97, 1
      %s99 = scalar_select %p96, %s97, %s98
      %p102 = pneg %p96
      %p103 = scmp.eq.s32.totalorder %s22, 3
      %p104 = por %p102, %p103
      %p105 = scmp.ne.s32.totalorder %s97, %s100
      %p106 = scmp.eq.s32.totalorder %s22, 0
      %p107 = por %p105, %p106
      %p108 = scmp.ne.s32.totalorder %s97, %s100
      %p109 = scmp.eq.s32.totalorder %s27, 3
      %p110 = por %p108, %p109
      %p111 = scmp.ne.s32.totalorder %s100, %s101
      %p112 = scmp.eq.s32.totalorder %s27, 0
      %p113 = por %p111, %p112
      %p114 = scmp.ne.s32.totalorder %s100, %s101
      %p115 = scmp.eq.s32.totalorder %s28, 3
      %p116 = por %p114, %p115
      %p118 = scmp.ne.s32.totalorder %s101, %s117
      %p119 = scmp.eq.s32.totalorder %s28, 0
      %p120 = por %p118, %p119
      %s121 = sadd.s32 %s30, %s31
      %s122 = sadd.s32 %s44, %s40
      %s123 = ssub.s32 %s29, %s48
      %s124 = ssub.s32 %s121, %s122
      %s125 = sor.u32 %s123, %s124
      %p126 = scmp.eq.s32.totalorder %s125, 0
      %s128 = sadd.s32 %s127, 1
      %s129 = scalar_select %p126, %s127, %s128
      %p132 = pneg %p126
      %p133 = scmp.eq.s32.totalorder %s22, 3
      %p134 = por %p132, %p133
      %p135 = scmp.ne.s32.totalorder %s127, %s130
      %p136 = scmp.eq.s32.totalorder %s22, 0
      %p137 = por %p135, %p136
      %p138 = scmp.ne.s32.totalorder %s127, %s130
      %p139 = scmp.eq.s32.totalorder %s27, 3
      %p140 = por %p138, %p139
      %p141 = scmp.ne.s32.totalorder %s130, %s131
      %p142 = scmp.eq.s32.totalorder %s27, 0
      %p143 = por %p141, %p142
      %p144 = scmp.ne.s32.totalorder %s130, %s131
      %p145 = scmp.eq.s32.totalorder %s28, 3
      %p146 = por %p144, %p145
      %p148 = scmp.ne.s32.totalorder %s131, %s147
      %p149 = scmp.eq.s32.totalorder %s28, 0
      %p150 = por %p148, %p149
      %s151 = sadd.s32 %s30, %s31
      %s152 = sadd.s32 %s44, %s40
      %s153 = ssub.s32 %s29, %s48
      %s154 = ssub.s32 %s151, %s152
      %s155 = sor.u32 %s153, %s154
      %p156 = scmp.eq.s32.totalorder %s155, 0
      %s158 = sadd.s32 %s157, 1
      %s159 = scalar_select %p156, %s157, %s158
      %p162 = pneg %p156
      %p163 = scmp.eq.s32.totalorder %s22, 3
      %p164 = por %p162, %p163
      %p165 = scmp.ne.s32.totalorder %s157, %s160
      %p166 = scmp.eq.s32.totalorder %s22, 0
      %p167 = por %p165, %p166
      %p168 = scmp.ne.s32.totalorder %s157, %s160
      %p169 = scmp.eq.s32.totalorder %s27, 3
      %p170 = por %p168, %p169
      %p171 = scmp.ne.s32.totalorder %s160, %s161
      %p172 = scmp.eq.s32.totalorder %s27, 0
      %p173 = por %p171, %p172
      %p174 = scmp.ne.s32.totalorder %s160, %s161
      %p175 = scmp.eq.s32.totalorder %s28, 3
      %p176 = por %p174, %p175
      %p178 = scmp.ne.s32.totalorder %s161, %s177
      %p179 = scmp.eq.s32.totalorder %s28, 0
      %p180 = por %p178, %p179
      %s181 = ssub.s32 %s29, %s48
      %s182 = ssub.s32 %s30, %s44
      %s183 = sor.u32 %s181, %s182
      %p184 = scmp.eq.s32.totalorder %s183, 0
      %s186 = sadd.s32 %s185, 1
      %s187 = scalar_select %p184, %s185, %s186
      %p190 = pneg %p184
      %p191 = scmp.eq.s32.totalorder %s22, 3
      %p192 = por %p190, %p191
      %p193 = scmp.ne.s32.totalorder %s185, %s188
      %p194 = scmp.eq.s32.totalorder %s22, 0
      %p195 = por %p193, %p194
      %p196 = scmp.ne.s32.totalorder %s185, %s188
      %p197 = scmp.eq.s32.totalorder %s27, 3
      %p198 = por %p196, %p197
      %p199 = scmp.ne.s32.totalorder %s188, %s189
      %p200 = scmp.eq.s32.totalorder %s27, 0
      %p201 = por %p199, %p200
      %p202 = scmp.ne.s32.totalorder %s188, %s189
      %p203 = scmp.eq.s32.totalorder %s28, 3
      %p204 = por %p202, %p203
      %p206 = scmp.ne.s32.totalorder %s189, %s205
      %p207 = scmp.eq.s32.totalorder %s28, 0
      %p208 = por %p206, %p207
      %p209 = scmp.le.s32.totalorder 1, %s22
      %p210 = scmp.lt.s32.totalorder %s22, 5
      %p211 = pnand %p209, %p210
      %p212 = pneg %p211
      // Predicated region
      $region9: #{tpu_custom_call.1} parent=5 // pred_check
        _
      $region10: #{tpu_custom_call.1} parent=5 // pred_check_branch
        %214 = sbr.rel (%p211) target = $region12
      $region11: #{tpu_custom_call.1} parent=5 // pred_region
        %s215 = ssub.s32 %s22, 1
        // Predicated region
        $region13: #{tpu_custom_call.1} parent=11 // pred_check
          %p216 = pneg %p62
        $region14: #{tpu_custom_call.1} parent=11 // pred_check_branch
          %218 = sbr.rel (%p216) target = $region16
        $region15: #{tpu_custom_call.1} parent=11 // pred_region
          %s220 = ssub.s32 16, 16
          %221 = vsyncadd [#allocation5], %s220
          %224 = dma.hbm_to_smem %s0, 16, [#allocation2], [#allocation5]
        $region16: #{tpu_custom_call.1} parent=11 // pred_fallthru
          _
        // Predicated region
        $region17: #{tpu_custom_call.1} parent=11 // pred_check
          %p225 = pneg %p83
        $region18: #{tpu_custom_call.1} parent=11 // pred_check_branch
          %227 = sbr.rel (%p225) target = $region20
        $region19: #{tpu_custom_call.1} parent=11 // pred_region
          %s229 = ssub.s32 16, 16
          %230 = vsyncadd [#allocation6], %s229
          %s232 = sshll.u32 %s1, 4
          %s233 = int_to_ptr.vmem [resolvable:$true] %s232
          %235 = dma.vmem_to_smem %s233, 16, [#allocation7], [#allocation6]
        $region20: #{tpu_custom_call.1} parent=11 // pred_fallthru
          _
      $region12: #{tpu_custom_call.1} parent=5 // pred_fallthru
        _
      %p236 = scmp.lt.s32.totalorder %s22, 4
      // Predicated region
      $region21: #{tpu_custom_call.1} parent=5 // pred_check
        %p237 = pneg %p236
      $region22: #{tpu_custom_call.1} parent=5 // pred_check_branch
        %239 = sbr.rel (%p237) target = $region24
      $region23: #{tpu_custom_call.1} parent=5 // pred_region
        // Predicated region
        $region25: #{tpu_custom_call.1} parent=23 // pred_check
          %p240 = pneg %p107
        $region26: #{tpu_custom_call.1} parent=23 // pred_check_branch
          %242 = sbr.rel (%p240) target = $region28
        $region27: #{tpu_custom_call.1} parent=23 // pred_region
          %s243 = sand.u32 %s97, 1
          %s244 = scalar_lea.sflag [#allocation3], %s243
          %s245 = sand.u32 %s97, 1
          %s246 = smul.addr %s245, 88
          %s247 = scalar_lea.vmem [#allocation8], %s246
          %s248 = sadd.s32 %s30, %s31
          %s250 = ssub.s32 1408, 1408
          %251 = vsyncadd %s244, %s250
          %s252 = smul.addr %s29, 44
          %s253 = sadd.s32 %s248, %s252
          %s254 = smul.addr %s253, 64
          %s255 = scalar_lea.hbm %s2, %s254
          %s256 = sshll.u32 %s247, 4
          %s257 = int_to_ptr.vmem [resolvable:$true] %s256
          %262 = dma.hbm_to_vmem [thread:$0]  %s255, 1408, %s257, %s244, 128, 64, 4
        $region28: #{tpu_custom_call.1} parent=23 // pred_fallthru
          _
        // Predicated region
        $region29: #{tpu_custom_call.1} parent=23 // pred_check
          %p263 = pneg %p137
        $region30: #{tpu_custom_call.1} parent=23 // pred_check_branch
          %265 = sbr.rel (%p263) target = $region32
        $region31: #{tpu_custom_call.1} parent=23 // pred_region
          %s266 = sand.u32 %s22, 1
          %s267 = scalar_lea.sflag [#allocation10], %s266
          %s268 = sand.u32 %s127, 1
          %s269 = smul.addr %s268, 4
          %s270 = scalar_lea.vmem [#allocation9], %s269
          %s271 = sadd.s32 %s30, %s31
          %s273 = ssub.s32 64, 64
          %274 = vsyncadd %s267, %s273
          %s275 = smul.addr %s29, 2
          %s276 = sadd.s32 %s271, %s275
          %s277 = smul.addr %s276, 64
          %s278 = scalar_lea.hbm %s3, %s277
          %s280 = sshll.u32 %s270, 4
          %s281 = int_to_ptr.vmem [resolvable:$true] %s280
          %283 = dma.hbm_to_vmem [thread:$0]  %s278, 64, %s281, %s267
        $region32: #{tpu_custom_call.1} parent=23 // pred_fallthru
          _
        // Predicated region
        $region33: #{tpu_custom_call.1} parent=23 // pred_check
          %p284 = pneg %p167
        $region34: #{tpu_custom_call.1} parent=23 // pred_check_branch
          %286 = sbr.rel (%p284) target = $region36
        $region35: #{tpu_custom_call.1} parent=23 // pred_region
          %s287 = sand.u32 %s22, 1
          %s288 = scalar_lea.sflag [#allocation10], %s287
          %s289 = sand.u32 %s157, 1
          %s290 = smul.addr %s289, 8
          %s291 = scalar_lea.vmem [#allocation11], %s290
          %s292 = sadd.s32 %s30, %s31
          %s294 = ssub.s32 128, 128
          %295 = vsyncadd %s288, %s294
          %s296 = smul.addr %s29, 2
          %s297 = sadd.s32 %s292, %s296
          %s298 = smul.addr %s297, 128
          %s299 = scalar_lea.hbm %s4, %s298
          %s301 = sshll.u32 %s291, 4
          %s302 = int_to_ptr.vmem [resolvable:$true] %s301
          %304 = dma.hbm_to_vmem [thread:$0]  %s299, 128, %s302, %s288
        $region36: #{tpu_custom_call.1} parent=23 // pred_fallthru
          _
      $region24: #{tpu_custom_call.1} parent=5 // pred_fallthru
        _
      %p305 = scmp.le.s32.totalorder 1, %s22
      %p306 = scmp.lt.s32.totalorder %s22, 5
      %p307 = pnand %p305, %p306
      %p308 = pneg %p307
      // Predicated region
      $region37: #{tpu_custom_call.1} parent=5 // pred_check
        _
      $region38: #{tpu_custom_call.1} parent=5 // pred_check_branch
        %310 = sbr.rel (%p307) target = $region40
      $region39: #{tpu_custom_call.1} parent=5 // pred_region
        %s311 = ssub.s32 %s22, 1
        // Predicated region
        $region41: #{tpu_custom_call.1} parent=39 // pred_check
          %p312 = pneg %p62
        $region42: #{tpu_custom_call.1} parent=39 // pred_check_branch
          %314 = sbr.rel (%p312) target = $region44
        $region43: #{tpu_custom_call.1} parent=39 // pred_region
          %315 = dma.done [#allocation5], 16
        $region44: #{tpu_custom_call.1} parent=39 // pred_fallthru
          _
        // Predicated region
        $region45: #{tpu_custom_call.1} parent=39 // pred_check
          %p316 = pneg %p83
        $region46: #{tpu_custom_call.1} parent=39 // pred_check_branch
          %318 = sbr.rel (%p316) target = $region48
        $region47: #{tpu_custom_call.1} parent=39 // pred_region
          %319 = dma.done [#allocation6], 16
        $region48: #{tpu_custom_call.1} parent=39 // pred_fallthru
          _
        %s320 = sand.u32 %s100, 1
        %s321 = scalar_lea.sflag [#allocation3], %s320
        %s322 = sand.u32 %s100, 1
        %s323 = smul.addr %s322, 88
        %s324 = scalar_lea.vmem [#allocation8], %s323
        // Predicated region
        $region49: #{tpu_custom_call.1} parent=39 // pred_check
          %p325 = pneg %p113
        $region50: #{tpu_custom_call.1} parent=39 // pred_check_branch
          %327 = sbr.rel (%p325) target = $region52
        $region51: #{tpu_custom_call.1} parent=39 // pred_region
          %328 = dma.done %s321, 1408
        $region52: #{tpu_custom_call.1} parent=39 // pred_fallthru
          _
        %s329 = sand.u32 %s27, 1
        %s330 = scalar_lea.sflag [#allocation10], %s329
        %s331 = sand.u32 %s130, 1
        %s332 = smul.addr %s331, 4
        %s333 = scalar_lea.vmem [#allocation9], %s332
        // Predicated region
        $region53: #{tpu_custom_call.1} parent=39 // pred_check
          %p334 = pneg %p143
        $region54: #{tpu_custom_call.1} parent=39 // pred_check_branch
          %336 = sbr.rel (%p334) target = $region56
        $region55: #{tpu_custom_call.1} parent=39 // pred_region
          %337 = dma.done %s330, 64
        $region56: #{tpu_custom_call.1} parent=39 // pred_fallthru
          _
        %s338 = sand.u32 %s27, 1
        %s339 = scalar_lea.sflag [#allocation10], %s338
        %s340 = sand.u32 %s160, 1
        %s341 = smul.addr %s340, 8
        %s342 = scalar_lea.vmem [#allocation11], %s341
        // Predicated region
        $region57: #{tpu_custom_call.1} parent=39 // pred_check
          %p343 = pneg %p173
        $region58: #{tpu_custom_call.1} parent=39 // pred_check_branch
          %345 = sbr.rel (%p343) target = $region60
        $region59: #{tpu_custom_call.1} parent=39 // pred_region
          %346 = dma.done %s339, 128
        $region60: #{tpu_custom_call.1} parent=39 // pred_fallthru
          _
        %347 = sfence
        %p348 = pneg %p62
        %p349 = pneg %p59
        %p350 = pneg %p83
        %p351 = pneg %p80
        %s352 = sand.u32 %s100, 1
        %s353 = scalar_lea.sflag [#allocation3], %s352
        %s354 = sand.u32 %s100, 1
        %s355 = smul.addr %s354, 88
        %s356 = scalar_lea.vmem [#allocation8], %s355
        %p357 = pneg %p113
        %p358 = pneg %p110
        %s359 = sand.u32 %s27, 1
        %s360 = scalar_lea.sflag [#allocation10], %s359
        %s361 = sand.u32 %s130, 1
        %s362 = smul.addr %s361, 4
        %s363 = scalar_lea.vmem [#allocation9], %s362
        %p364 = pneg %p143
        %p365 = pneg %p140
        %s366 = sand.u32 %s27, 1
        %s367 = scalar_lea.sflag [#allocation10], %s366
        %s368 = sand.u32 %s160, 1
        %s369 = smul.addr %s368, 8
        %s370 = scalar_lea.vmem [#allocation11], %s369
        %p371 = pneg %p173
        %p372 = pneg %p170
        %p373 = pneg %p201
        %p374 = pneg %p198
        %s375 = sand.u32 %s188, 1
        %s376 = scalar_lea.sflag [#allocation4], %s375
        %s377 = sand.u32 %s188, 1
        %s378 = smul.addr %s377, 8
        %s379 = scalar_lea.vmem [#allocation12], %s378
        %s380 = sadd.s32 %s33, %s34
        %s381 = sadd.s32 %s33, %s34
        %s382 = sadd.s32 %s33, %s34
        %p383 = scmp.eq.s32.totalorder %s34, 0
        // Predicated region
        $region61: #{tpu_custom_call.1} parent=39 // pred_check
          %p384 = pneg %p383
        $region62: #{tpu_custom_call.1} parent=39 // pred_check_branch
          %386 = sbr.rel (%p384) target = $region64
        $region63: #{tpu_custom_call.1} parent=39 // pred_region
          %387 = vst [vmem:[%s379] sm:$0xff] 0.0
        $region64: #{tpu_custom_call.1} parent=39 // pred_fallthru
          _
        %v388 = vld [vmem:[%s342] sm:$0xff]
        %v389 = vand.u32 %v388, 511
        %v390 = vshra.s32 %v388, 9
        %vm391 = vcmp.ne.s32.totalorder %v389, 255
        %v392 = vsel %vm391, 1, 0
        %v393 = vcvt.s32.f32 %v392
        %v394 = vld [vmem:[%s324] sm:$0xf]
        %s395 = scalar_lea.vmem %s324, 4 [#allocation8]
        %v396 = vld [vmem:[%s395] sm:$0xf]
        %v397 = vmax.bf16 %v394, %v396
        %s398 = scalar_lea.vmem %s324, 8 [#allocation8]
        %v399 = vld [vmem:[%s398] sm:$0xf]
        %v400 = vmax.bf16 %v397, %v399
        %s401 = scalar_lea.vmem %s324, 12 [#allocation8]
        %v402 = vld [vmem:[%s401] sm:$0xf]
        %v403 = vmax.bf16 %v400, %v402
        %s404 = scalar_lea.vmem %s324, 16 [#allocation8]
        %v405 = vld [vmem:[%s404] sm:$0xf]
        %v406 = vmax.bf16 %v403, %v405
        %s407 = scalar_lea.vmem %s324, 20 [#allocation8]
        %v408 = vld [vmem:[%s407] sm:$0xf]
        %v409 = vmax.bf16 %v406, %v408
        %s410 = scalar_lea.vmem %s324, 24 [#allocation8]
        %v411 = vld [vmem:[%s410] sm:$0xf]
        %v412 = vmax.bf16 %v409, %v411
        %s413 = scalar_lea.vmem %s324, 28 [#allocation8]
        %v414 = vld [vmem:[%s413] sm:$0xf]
        %v415 = vmax.bf16 %v412, %v414
        %s416 = scalar_lea.vmem %s324, 32 [#allocation8]
        %v417 = vld [vmem:[%s416] sm:$0xf]
        %v418 = vmax.bf16 %v415, %v417
        %s419 = scalar_lea.vmem %s324, 36 [#allocation8]
        %v420 = vld [vmem:[%s419] sm:$0xf]
        %v421 = vmax.bf16 %v418, %v420
        %s422 = scalar_lea.vmem %s324, 40 [#allocation8]
        %v423 = vld [vmem:[%s422] sm:$0xf]
        %v424 = vmax.bf16 %v421, %v423
        %v425 = vunpack.c.l.bf16 %v424
        %v426 = vunpack.c.l.bf16 %v394
        %v427 = vsub.f32 %v426, %v425
        %v428 = vmul.f32 %v427, 1.442695
        %v429 = vpow.pop %v428
        %v430 = vadd.f32 %v429, 0.0
        %vm431 = vcmp.eq.s32.totalorder %v389, 0
        %v432 = vsel %vm431, %v427, 0.0
        %v433 = vunpack.c.l.bf16 %v396
        %v434 = vsub.f32 %v433, %v425
        %v435 = vmul.f32 %v434, 1.442695
        %v436 = vpow.pop %v435
        %v437 = vadd.f32 %v430, %v436
        %vm438 = vcmp.eq.s32.totalorder %v389, 1
        %v439 = vsel %vm438, %v434, %v432
        %v440 = vunpack.c.l.bf16 %v399
        %v441 = vsub.f32 %v440, %v425
        %v442 = vmul.f32 %v441, 1.442695
        %v443 = vpow.pop %v442
        %v444 = vadd.f32 %v437, %v443
        %vm445 = vcmp.eq.s32.totalorder %v389, 2
        %v446 = vsel %vm445, %v441, %v439
        %v447 = vunpack.c.l.bf16 %v402
        %v448 = vsub.f32 %v447, %v425
        %v449 = vmul.f32 %v448, 1.442695
        %v450 = vpow.pop %v449
        %v451 = vadd.f32 %v444, %v450
        %vm452 = vcmp.eq.s32.totalorder %v389, 3
        %v453 = vsel %vm452, %v448, %v446
        %v454 = vunpack.c.l.bf16 %v405
        %v455 = vsub.f32 %v454, %v425
        %v456 = vmul.f32 %v455, 1.442695
        %v457 = vpow.pop %v456
        %v458 = vadd.f32 %v451, %v457
        %vm459 = vcmp.eq.s32.totalorder %v389, 4
        %v460 = vsel %vm459, %v455, %v453
        %v461 = vunpack.c.l.bf16 %v408
        %v462 = vsub.f32 %v461, %v425
        %v463 = vmul.f32 %v462, 1.442695
        %v464 = vpow.pop %v463
        %v465 = vadd.f32 %v458, %v464
        %vm466 = vcmp.eq.s32.totalorder %v389, 5
        %v467 = vsel %vm466, %v462, %v460
        %v468 = vunpack.c.l.bf16 %v411
        %v469 = vsub.f32 %v468, %v425
        %v470 = vmul.f32 %v469, 1.442695
        %v471 = vpow.pop %v470
        %v472 = vadd.f32 %v465, %v471
        %vm473 = vcmp.eq.s32.totalorder %v389, 6
        %v474 = vsel %vm473, %v469, %v467
        %v475 = vunpack.c.l.bf16 %v414
        %v476 = vsub.f32 %v475, %v425
        %v477 = vmul.f32 %v476, 1.442695
        %v478 = vpow.pop %v477
        %v479 = vadd.f32 %v472, %v478
        %vm480 = vcmp.eq.s32.totalorder %v389, 7
        %v481 = vsel %vm480, %v476, %v474
        %v482 = vunpack.c.l.bf16 %v417
        %v483 = vsub.f32 %v482, %v425
        %v484 = vmul.f32 %v483, 1.442695
        %v485 = vpow.pop %v484
        %v486 = vadd.f32 %v479, %v485
        %vm487 = vcmp.eq.s32.totalorder %v389, 8
        %v488 = vsel %vm487, %v483, %v481
        %v489 = vunpack.c.l.bf16 %v420
        %v490 = vsub.f32 %v489, %v425
        %v491 = vmul.f32 %v490, 1.442695
        %v492 = vpow.pop %v491
        %v493 = vadd.f32 %v486, %v492
        %vm494 = vcmp.eq.s32.totalorder %v389, 9
        %v495 = vsel %vm494, %v490, %v488
        %v496 = vunpack.c.l.bf16 %v423
        %v497 = vsub.f32 %v496, %v425
        %v498 = vmul.f32 %v497, 1.442695
        %v499 = vpow.pop %v498
        %v500 = vadd.f32 %v493, %v499
        %vm501 = vcmp.eq.s32.totalorder %v389, 10
        %v502 = vsel %vm501, %v497, %v495
        %v503 = vlog2.pop %v500
        %v504 = vmul.f32 %v503, 0.6931472
        %v505 = vsub.f32 %v504, %v502
        %v506 = vmul.f32 %v505, %v393
        %s507 = scalar_lea.vmem %s324, 44 [#allocation8]
        %v508 = vld [vmem:[%s507] sm:$0xf]
        %s509 = scalar_lea.vmem %s324, 48 [#allocation8]
        %v510 = vld [vmem:[%s509] sm:$0xf]
        %v511 = vmax.bf16 %v508, %v510
        %s512 = scalar_lea.vmem %s324, 52 [#allocation8]
        %v513 = vld [vmem:[%s512] sm:$0xf]
        %v514 = vmax.bf16 %v511, %v513
        %s515 = scalar_lea.vmem %s324, 56 [#allocation8]
        %v516 = vld [vmem:[%s515] sm:$0xf]
        %v517 = vmax.bf16 %v514, %v516
        %s518 = scalar_lea.vmem %s324, 60 [#allocation8]
        %v519 = vld [vmem:[%s518] sm:$0xf]
        %v520 = vmax.bf16 %v517, %v519
        %s521 = scalar_lea.vmem %s324, 64 [#allocation8]
        %v522 = vld [vmem:[%s521] sm:$0xf]
        %v523 = vmax.bf16 %v520, %v522
        %s524 = scalar_lea.vmem %s324, 68 [#allocation8]
        %v525 = vld [vmem:[%s524] sm:$0xf]
        %v526 = vmax.bf16 %v523, %v525
        %s527 = scalar_lea.vmem %s324, 72 [#allocation8]
        %v528 = vld [vmem:[%s527] sm:$0xf]
        %v529 = vmax.bf16 %v526, %v528
        %s530 = scalar_lea.vmem %s324, 76 [#allocation8]
        %v531 = vld [vmem:[%s530] sm:$0xf]
        %v532 = vmax.bf16 %v529, %v531
        %s533 = scalar_lea.vmem %s324, 80 [#allocation8]
        %v534 = vld [vmem:[%s533] sm:$0xf]
        %v535 = vmax.bf16 %v532, %v534
        %s536 = scalar_lea.vmem %s324, 84 [#allocation8]
        %v537 = vld [vmem:[%s536] sm:$0xf]
        %v538 = vmax.bf16 %v535, %v537
        %v539 = vunpack.c.l.bf16 %v538
        %v540 = vunpack.c.l.bf16 %v508
        %v541 = vsub.f32 %v540, %v539
        %v542 = vmul.f32 %v541, 1.442695
        %v543 = vpow.pop %v542
        %v544 = vadd.f32 %v543, 0.0
        %v545 = vsel %vm431, %v541, 0.0
        %v546 = vunpack.c.l.bf16 %v510
        %v547 = vsub.f32 %v546, %v539
        %v548 = vmul.f32 %v547, 1.442695
        %v549 = vpow.pop %v548
        %v550 = vadd.f32 %v544, %v549
        %v551 = vsel %vm438, %v547, %v545
        %v552 = vunpack.c.l.bf16 %v513
        %v553 = vsub.f32 %v552, %v539
        %v554 = vmul.f32 %v553, 1.442695
        %v555 = vpow.pop %v554
        %v556 = vadd.f32 %v550, %v555
        %v557 = vsel %vm445, %v553, %v551
        %v558 = vunpack.c.l.bf16 %v516
        %v559 = vsub.f32 %v558, %v539
        %v560 = vmul.f32 %v559, 1.442695
        %v561 = vpow.pop %v560
        %v562 = vadd.f32 %v556, %v561
        %v563 = vsel %vm452, %v559, %v557
        %v564 = vunpack.c.l.bf16 %v519
        %v565 = vsub.f32 %v564, %v539
        %v566 = vmul.f32 %v565, 1.442695
        %v567 = vpow.pop %v566
        %v568 = vadd.f32 %v562, %v567
        %v569 = vsel %vm459, %v565, %v563
        %v570 = vunpack.c.l.bf16 %v522
        %v571 = vsub.f32 %v570, %v539
        %v572 = vmul.f32 %v571, 1.442695
        %v573 = vpow.pop %v572
        %v574 = vadd.f32 %v568, %v573
        %v575 = vsel %vm466, %v571, %v569
        %v576 = vunpack.c.l.bf16 %v525
        %v577 = vsub.f32 %v576, %v539
        %v578 = vmul.f32 %v577, 1.442695
        %v579 = vpow.pop %v578
        %v580 = vadd.f32 %v574, %v579
        %v581 = vsel %vm473, %v577, %v575
        %v582 = vunpack.c.l.bf16 %v528
        %v583 = vsub.f32 %v582, %v539
        %v584 = vmul.f32 %v583, 1.442695
        %v585 = vpow.pop %v584
        %v586 = vadd.f32 %v580, %v585
        %v587 = vsel %vm480, %v583, %v581
        %v588 = vunpack.c.l.bf16 %v531
        %v589 = vsub.f32 %v588, %v539
        %v590 = vmul.f32 %v589, 1.442695
        %v591 = vpow.pop %v590
        %v592 = vadd.f32 %v586, %v591
        %v593 = vsel %vm487, %v589, %v587
        %v594 = vunpack.c.l.bf16 %v534
        %v595 = vsub.f32 %v594, %v539
        %v596 = vmul.f32 %v595, 1.442695
        %v597 = vpow.pop %v596
        %v598 = vadd.f32 %v592, %v597
        %v599 = vsel %vm494, %v595, %v593
        %v600 = vunpack.c.l.bf16 %v537
        %v601 = vsub.f32 %v600, %v539
        %v602 = vmul.f32 %v601, 1.442695
        %v603 = vpow.pop %v602
        %v604 = vadd.f32 %v598, %v603
        %v605 = vsel %vm501, %v601, %v599
        %v606 = vlog2.pop %v604
        %v607 = vmul.f32 %v606, 0.6931472
        %v608 = vsub.f32 %v607, %v605
        %v609 = vmul.f32 %v608, %v393
        %v610 = vld [vmem:[%s333] sm:$0xf]
        %v611 = vunpack.c.l.bf16 %v610
        %vm612 = vcmp.eq.s32.totalorder %v390, 1
        %v613 = vsub.f32 0.0, %v611
        %v614 = vsel %vm612, %v613, %v611
        %v615 = vmax.f32 %v614, 0.0
        %v616 = vand.u32 2147483647, %v614
        %v617 = vsub.f32 0.0, %v616
        %v618 = vmul.f32 %v617, 1.442695
        %v619 = vpow.pop %v618
        %v620 = vadd.f32 %v619, 1.0
        %v621 = vlog2.pop %v620
        %v622 = vmul.f32 %v621, 0.6931472
        %v623 = vadd.f32 %v615, %v622
        %s624 = sld [smem:[#allocation2 + $0x1]]
        %vm625 = vcmp.eq.s32.totalorder %v390, 0
        %s626 = sld [smem:[#allocation2]]
        %v627 = vstv %s626
        %v628 = vsel %vm625, %v627, 0.0
        %v629 = vstv %s624
        %v630 = vsel %vm612, %v629, %v628
        %s631 = sld [smem:[#allocation7 + %s32]]
        %s632 = sadd.f32 %s631, 1.0
        %v633 = vstv %s632
        %v634 = vrcp.pop %v633
        %s635 = vtos %v634
        %v636 = vsel %vm612, 1, 0
        %v637 = vcvt.s32.f32 %v636
        %v638 = vmul.f32 %v506, %v637
        %v639 = vstv %s635
        %v640 = vmul.f32 %v638, %v639
        %v641 = vmul.f32 %v630, %v623
        %v642 = vlaneseq
        %v643 = vshrl.u32 %v642, 7
        %v644 = vrot.slane %v506, 4
        %v645 = vadd.f32 %v506, %v644
        %v646 = vrot.slane %v645, 2
        %v647 = vadd.f32 %v645, %v646
        %v648 = vrot.slane %v647, 1
        %v649 = vadd.f32 %v647, %v648
        %vm650 = vcmp.eq.s32.totalorder %v643, 0
        %v651 = vsel %vm650, %v649, 0.0
        %v652 = vrot.slane %v393, 4
        %v653 = vadd.f32 %v393, %v652
        %v654 = vrot.slane %v653, 2
        %v655 = vadd.f32 %v653, %v654
        %v656 = vrot.slane %v655, 1
        %v657 = vadd.f32 %v655, %v656
        %vm658 = vcmp.eq.s32.totalorder %v643, 1
        %v659 = vsel %vm658, %v657, %v651
        %v660 = vrot.slane %v609, 4
        %v661 = vadd.f32 %v609, %v660
        %v662 = vrot.slane %v661, 2
        %v663 = vadd.f32 %v661, %v662
        %v664 = vrot.slane %v663, 1
        %v665 = vadd.f32 %v663, %v664
        %vm666 = vcmp.eq.s32.totalorder %v643, 2
        %v667 = vsel %vm666, %v665, %v659
        %v668 = vrot.slane %v641, 4
        %v669 = vadd.f32 %v641, %v668
        %v670 = vrot.slane %v669, 2
        %v671 = vadd.f32 %v669, %v670
        %v672 = vrot.slane %v671, 1
        %v673 = vadd.f32 %v671, %v672
        %vm674 = vcmp.eq.s32.totalorder %v643, 3
        %v675 = vsel %vm674, %v673, %v667
        %v676 = vrot.slane %v630, 4
        %v677 = vadd.f32 %v630, %v676
        %v678 = vrot.slane %v677, 2
        %v679 = vadd.f32 %v677, %v678
        %v680 = vrot.slane %v679, 1
        %v681 = vadd.f32 %v679, %v680
        %vm682 = vcmp.eq.s32.totalorder %v643, 4
        %v683 = vsel %vm682, %v681, %v675
        %v684 = vrot.slane %v640, 4
        %v685 = vadd.f32 %v640, %v684
        %v686 = vrot.slane %v685, 2
        %v687 = vadd.f32 %v685, %v686
        %v688 = vrot.slane %v687, 1
        %v689 = vadd.f32 %v687, %v688
        %vm690 = vcmp.eq.s32.totalorder %v643, 5
        %v691 = vsel %vm690, %v689, %v683
        %v692 = vld [vmem:[%s379] sm:$0xff]
        %v693 = vadd.f32 %v692, %v691
        %694 = vst [vmem:[%s379] sm:$0xff] %v693
        %s695 = sand.u32 %s188, 1
        %s696 = scalar_lea.sflag [#allocation4], %s695
        %s697 = sand.u32 %s188, 1
        %s698 = smul.addr %s697, 8
        %s699 = scalar_lea.vmem [#allocation12], %s698
        // Predicated region
        $region65: #{tpu_custom_call.1} parent=39 // pred_check
          %p700 = pneg %p198
        $region66: #{tpu_custom_call.1} parent=39 // pred_check_branch
          %702 = sbr.rel (%p700) target = $region68
        $region67: #{tpu_custom_call.1} parent=39 // pred_region
          %s704 = ssub.s32 128, 128
          %705 = vsyncadd %s696, %s704
          %s706 = smul.addr %s32, 2
          %s707 = sadd.s32 %s33, %s706
          %s708 = smul.addr %s707, 128
          %s709 = scalar_lea.hbm %s5, %s708
          %s711 = sshll.u32 %s699, 4
          %s712 = int_to_ptr.vmem [resolvable:$true] %s711
          %714 = dma.vmem_to_hbm [thread:$0]  %s712, 128, %s709, %s696
        $region68: #{tpu_custom_call.1} parent=39 // pred_fallthru
          _
      $region40: #{tpu_custom_call.1} parent=5 // pred_fallthru
        _
      %p715 = scmp.le.s32.totalorder 2, %s22
      // Predicated region
      $region69: #{tpu_custom_call.1} parent=5 // pred_check
        %p716 = pneg %p715
      $region70: #{tpu_custom_call.1} parent=5 // pred_check_branch
        %718 = sbr.rel (%p716) target = $region72
      $region71: #{tpu_custom_call.1} parent=5 // pred_region
        %s719 = ssub.s32 %s22, 2
        // Predicated region
        $region73: #{tpu_custom_call.1} parent=71 // pred_check
          %p720 = pneg %p204
        $region74: #{tpu_custom_call.1} parent=71 // pred_check_branch
          %722 = sbr.rel (%p720) target = $region76
        $region75: #{tpu_custom_call.1} parent=71 // pred_region
          %s723 = sand.u32 %s189, 1
          %s724 = scalar_lea.sflag [#allocation4], %s723
          %s725 = sand.u32 %s189, 1
          %s726 = smul.addr %s725, 8
          %s727 = scalar_lea.vmem [#allocation12], %s726
          %728 = dma.done %s724, 128
        $region76: #{tpu_custom_call.1} parent=71 // pred_fallthru
          _
      $region72: #{tpu_custom_call.1} parent=5 // pred_fallthru
        _
    $region6: #{tpu_custom_call.1} parent=1 // loop_footer
      %s26 = sadd.s32 1, %s22
    $region7: #{tpu_custom_call.1} parent=1 // loop_footer_branch
      %21 = sbr.rel target = $region3
    $region8: #{tpu_custom_call.1} parent=1 // loop_exit
      _
    %729 = vsyncpa [#allocation3], 1
    %s730 = scalar_lea.sflag [#allocation3], 1
    %731 = vsyncpa %s730, 1
    %732 = vsyncpa [#allocation10], 1
    %s733 = scalar_lea.sflag [#allocation10], 1
    %734 = vsyncpa %s733, 1
    %735 = vsyncpa [#allocation4], 1
    %s736 = scalar_lea.sflag [#allocation4], 1
    %737 = vsyncpa %s736, 1
    %738 = vsyncpa [#allocation5], 1
    %s739 = scalar_lea.sflag [#allocation5], 1
    %740 = vsyncpa %s739, 1
    %741 = vsyncpa [#allocation6], 1
    %s742 = scalar_lea.sflag [#allocation6], 1
    %743 = vsyncpa %s742, 1

</llo_original>
